<compile_context>
chip_gen: v7x
topology: tpu7x:2x2x1
jax: 0.10.0
libtpu: 0.0.40
codegen_flags: <defaults>
</compile_context>

<pallas_src>
import jax
import jax.numpy as jnp
from jax.experimental import pallas as pl
from jax.experimental.pallas import tpu as pltpu


# ----------------------------------------------------------------------------
# In-kernel math helpers
# ----------------------------------------------------------------------------
def _gelu(x):
    # tanh-approx GELU; runs in x.dtype (bf16 inside the kernel so v6e/v7x use
    # the bf16 VALU/EUP).
    # TODO(synk): PyTorch nn.GELU default is the exact erf form; the ~1e-3
    # deviation is covered by the tolerance test in __main__.
    c = 0.7978845608028654  # sqrt(2/pi)
    return 0.5 * x * (1.0 + jnp.tanh(c * (x + 0.044715 * x * x * x)))


# ----------------------------------------------------------------------------
# Kernel: fused output_upscaling + selected-class mask contraction.
#
#   x    : (1, T, C)        bf16  tile of flattened spatial positions
#   w1   : (C, 4*C1)        bf16  ConvT#1 weights, 4 sub-pixel slabs concat'd
#   b1   : (1, 4*C1)        f32   bias tiled per slab
#   avg  : (4*C1, 8)        bf16  per-block averaging matrix (cols 4..7 zero)
#   ex   : (8, 4*C1)        bf16  0/1 block-expansion matrix (rows 4..7 zero)
#   lnw  : (1, 4*C1)        f32   LayerNorm2d affine (tiled)
#   lnb  : (1, 4*C1)        f32
#   w2   : (4*C1, 16*C2)    bf16  ConvT#2 block-diagonal weight
#   b2   : (1, 16*C2)       f32
#   wh   : (1, 16*C2, 16)   bf16  per-batch block-diag hyper_in weight
#   out  : (1, T, 16)       f32   per-sub-pixel mask values
# ----------------------------------------------------------------------------
def upscale_mask_kernel(x_ref, w1_ref, b1_ref, avg_ref, ex_ref, lnw_ref,
                        lnb_ref, w2_ref, b2_ref, wh_ref, o_ref):
    x = x_ref[0]                                        # (T, C)      bf16
    w1 = w1_ref[...]                                    # (C, 4C1)    bf16
    b1 = b1_ref[...]                                    # (1, 4C1)    f32
    avg = avg_ref[...]                                  # (4C1, 8)    bf16
    ex = ex_ref[...]                                    # (8, 4C1)    bf16
    lnw = lnw_ref[...]                                  # (1, 4C1)    f32
    lnb = lnb_ref[...]                                  # (1, 4C1)    f32
    w2 = w2_ref[...]                                    # (4C1, 16C2) bf16
    b2 = b2_ref[...]                                    # (1, 16C2)   f32
    wh = wh_ref[0]                                      # (16C2, 16)  bf16

    # ConvT#1 for all 4 sub-pixels in one bf16 MXU push, f32 accumulation.
    y1 = jnp.dot(x, w1, preferred_element_type=jnp.float32) + b1    # (T, 4C1)

    # LayerNorm2d over each C1-channel block, skinny two-pass stats:
    #   mean/var via a (4C1, 8) averaging matmul  -> (T, 8) stats,
    #   broadcast back via an (8, 4C1) 0/1 expansion matmul (K=8 -> ~free).
    mu_s = jnp.dot(y1.astype(jnp.bfloat16), avg,
                   preferred_element_type=jnp.float32)              # (T, 8)
    mu = jnp.dot(mu_s.astype(jnp.bfloat16), ex,
                 preferred_element_type=jnp.float32)                # (T, 4C1)
    d = y1 - mu
    var_s = jnp.dot((d * d).astype(jnp.bfloat16), avg,
                    preferred_element_type=jnp.float32)             # (T, 8)
    inv_s = jax.lax.rsqrt(var_s + 1e-6)
    inv = jnp.dot(inv_s.astype(jnp.bfloat16), ex,
                  preferred_element_type=jnp.float32)               # (T, 4C1)
    y1n = d * (inv * lnw) + lnb                                     # f32

    # GELU in bf16; output feeds the MXU directly as a bf16 operand.
    g1 = _gelu(y1n.astype(jnp.bfloat16))                            # (T, 4C1)

    # ConvT#2 for all 16 (s, e) sub-pixels in one block-diagonal MXU push.
    y2 = jnp.dot(g1, w2, preferred_element_type=jnp.float32) + b2   # (T, 16C2)
    g2 = _gelu(y2.astype(jnp.bfloat16))                             # (T, 16C2)

    # masks_blocked[t, k] = sum_p g2[t, k*C2 + p] * hyper[p]
    o_ref[0] = jnp.dot(g2, wh,
                       preferred_element_type=jnp.float32).astype(o_ref.dtype)


def _pick_tile(hw, b, cap=1024):
    """Largest lane-friendly hw tile: divides hw, multiple of 128 (or == hw)."""
    cap = min(cap, hw)
    if b == 1 and hw % 256 == 0:
        cap = min(cap, hw // 2)   # keep >=2 hw tiles so both v7x TCs get work
    if cap >= hw:
        return hw
    for t in range(cap, 127, -1):
        if hw % t == 0 and t % 128 == 0:
            return t
    return hw


def upscale_and_mask(x_bf16, whyp_bf16, p):
    b, hw, C = x_bf16.shape
    C1, C2 = C // 4, C // 8
    tile_hw = _pick_tile(hw, b)
    nt = hw // tile_hw
    return pl.pallas_call(
        upscale_mask_kernel,
        out_shape=jax.ShapeDtypeStruct((b, hw, 16), jnp.float32),
        grid=(b, nt),
        in_specs=[
            pl.BlockSpec((1, tile_hw, C), lambda i, t: (i, t, 0)),
            pl.BlockSpec((C, 4 * C1), lambda i, t: (0, 0)),
            pl.BlockSpec((1, 4 * C1), lambda i, t: (0, 0)),
            pl.BlockSpec((4 * C1, 8), lambda i, t: (0, 0)),
            pl.BlockSpec((8, 4 * C1), lambda i, t: (0, 0)),
            pl.BlockSpec((1, 4 * C1), lambda i, t: (0, 0)),
            pl.BlockSpec((1, 4 * C1), lambda i, t: (0, 0)),
            pl.BlockSpec((4 * C1, 16 * C2), lambda i, t: (0, 0)),
            pl.BlockSpec((1, 16 * C2), lambda i, t: (0, 0)),
            pl.BlockSpec((1, 16 * C2, 16), lambda i, t: (i, 0, 0)),
        ],
        out_specs=pl.BlockSpec((1, tile_hw, 16), lambda i, t: (i, t, 0)),
        compiler_params=pltpu.CompilerParams(
            dimension_semantics=("parallel", "parallel"),
            vmem_limit_bytes=32 * 1024 * 1024),
    )(x_bf16, p["w1_cat"], p["b1_cat"], p["ln_avg8"], p["ln_ex8"],
      p["ln_w_cat"], p["ln_b_cat"], p["w2_bd"], p["b2_cat"], whyp_bf16)


# ----------------------------------------------------------------------------
# Plain-JAX glue (shared by the kernel path and the f32 reference)
# ----------------------------------------------------------------------------
def standin_transformer(src_nchw, pos_nchw, tokens, p):
    # TODO(synk): the real `self.transformer` (SAM TwoWayTransformer) is an
    # injected external module; this is a deterministic single-head
    # cross-attention stand-in (plain-JAX glue).
    b, c, h, w = src_nchw.shape
    kv = (src_nchw + pos_nchw).reshape(b, c, h * w).transpose(0, 2, 1)  # (b,hw,c)
    q = tokens @ p["wq"]
    k = kv @ p["wk"]
    v = kv @ p["wv"]
    attn = jax.nn.softmax((q @ jnp.swapaxes(k, 1, 2)) / jnp.sqrt(float(c)),
                          axis=-1)
    hs = tokens + attn @ v                                              # (b,n,c)
    return hs, kv                                                       # (b,hw,c)


def hyper_mlp(hs_sel, w1, b1, w2, b2, w3, b3):
    # 3-layer MLP (Linear+ReLU x2, Linear) for the selected class only.
    # Plain XLA: b rows pad to 8 sublanes; a pallas_call is pure overhead here.
    h1 = jax.nn.relu(hs_sel @ w1 + b1)
    h2 = jax.nn.relu(h1 @ w2 + b2)
    return h2 @ w3 + b3


def dq_decoder_forward(src, pos_src, tokens, domain_seq, params):
    b, c, h, w = src.shape
    C2 = c // 8

    hs, src_seq = standin_transformer(src, pos_src, tokens, params)

    # Hypernetwork MLP for the selected class only (domain_seq is static).
    hs_sel = hs[:, domain_seq, :]                                    # (b, C)
    hyper_sel = hyper_mlp(
        hs_sel,
        params["mlp_w1"][domain_seq], params["mlp_b1"][domain_seq],
        params["mlp_w2"][domain_seq], params["mlp_b2"][domain_seq],
        params["mlp_w3"][domain_seq], params["mlp_b3"][domain_seq])  # (b, C2)

    # Per-batch block-diag hyper weight: W[b, k*C2 + p, k] = hyper[b, p] (bf16).
    eye16 = jnp.eye(16, dtype=jnp.float32)
    whyp = jnp.einsum("ij,bc->bicj", eye16, hyper_sel).reshape(
        b, 16 * C2, 16).astype(jnp.bfloat16)

    # Fused output_upscaling + mask contraction (Pallas), bf16 MXU operands.
    masks_blk = upscale_and_mask(src_seq.astype(jnp.bfloat16), whyp, params)

    # Pixel shuffle on the tiny (b, hw, 16) tensor: lanes are (di, dj, ei, ej),
    # output pixel (4i + 2di + ei, 4j + 2dj + ej).
    mb = masks_blk.reshape(b, h, w, 2, 2, 2, 2)
    masks = mb.transpose(0, 1, 3, 5, 2, 4, 6).reshape(b, 4 * h, 4 * w)
    return masks[:, None, :, :]                                      # (b,1,4h,4w)


def dq_decoder_reference(src, pos_src, tokens, domain_seq, params):
    # Pure-JAX f32 reference with PyTorch semantics (erf GELU, f32 LayerNorm2d).
    b, c, h, w = src.shape
    raw = params["raw"]
    C1, C2 = c // 4, c // 8

    hs, src_seq = standin_transformer(src, pos_src, tokens, params)
    hs_sel = hs[:, domain_seq, :]
    hyper_sel = hyper_mlp(
        hs_sel,
        params["mlp_w1"][domain_seq], params["mlp_b1"][domain_seq],
        params["mlp_w2"][domain_seq], params["mlp_b2"][domain_seq],
        params["mlp_w3"][domain_seq], params["mlp_b3"][domain_seq])

    x = src_seq.transpose(0, 2, 1).reshape(b, c, h, w)
    # ConvTranspose2d(C, C1, kernel=2, stride=2)
    y1 = jnp.einsum("bchw,codv->bohdwv", x, raw["w1"]).reshape(b, C1, 2 * h, 2 * w)
    y1 = y1 + raw["b1"][None, :, None, None]
    # LayerNorm2d(C1), eps=1e-6
    u = y1.mean(axis=1, keepdims=True)
    s = ((y1 - u) ** 2).mean(axis=1, keepdims=True)
    y1 = (y1 - u) / jnp.sqrt(s + 1e-6)
    y1 = raw["ln_w"][None, :, None, None] * y1 + raw["ln_b"][None, :, None, None]
    y1 = jax.nn.gelu(y1, approximate=False)
    # ConvTranspose2d(C1, C2, kernel=2, stride=2)
    y2 = jnp.einsum("bchw,codv->bohdwv", y1, raw["w2"]).reshape(b, C2, 4 * h, 4 * w)
    y2 = y2 + raw["b2"][None, :, None, None]
    y2 = jax.nn.gelu(y2, approximate=False)
    masks = jnp.einsum("bc,bchw->bhw", hyper_sel, y2)
    return masks[:, None, :, :]


# ----------------------------------------------------------------------------
# Deterministic parameter construction (shapes per DQDecoder.__init__),
# pre-fused into the layouts the kernel consumes.
# ----------------------------------------------------------------------------
def init_params(key, C, class_num):
    C1, C2 = C // 4, C // 8
    keys = jax.random.split(key, 16)

    def nrm(k, shape, scale=0.15):
        return (scale * jax.random.normal(k, shape)).astype(jnp.float32)

    w1 = nrm(keys[0], (C, C1, 2, 2))     # ConvTranspose2d #1: (Cin, Cout, kH, kW)
    b1 = nrm(keys[1], (C1,))
    ln_w = 1.0 + nrm(keys[2], (C1,))     # LayerNorm2d affine
    ln_b = nrm(keys[3], (C1,))
    w2 = nrm(keys[4], (C1, C2, 2, 2))    # ConvTranspose2d #2
    b2 = nrm(keys[5], (C2,))

    # Fused ConvT#1 weight: columns ordered (s = di*2+dj, c1).
    w1_cat = jnp.transpose(w1, (0, 2, 3, 1)).reshape(C, 4 * C1)
    # Fused block-diagonal ConvT#2 weight: rows (s, c1), cols (s*4+e, c2).
    w2_cat = jnp.transpose(w2, (0, 2, 3, 1)).reshape(C1, 4 * C2)
    w2_bd = jnp.kron(jnp.eye(4, dtype=jnp.float32), w2_cat)        # (4C1, 16C2)
    # Skinny LayerNorm2d helpers, padded to 8 stat columns / rows.
    ln_avg4 = jnp.kron(jnp.eye(4, dtype=jnp.float32),
                       jnp.full((C1, 1), 1.0 / C1, dtype=jnp.float32))  # (4C1,4)
    ln_ex4 = jnp.kron(jnp.eye(4, dtype=jnp.float32),
                      jnp.ones((1, C1), dtype=jnp.float32))             # (4,4C1)
    ln_avg8 = jnp.pad(ln_avg4, ((0, 0), (0, 4)))                        # (4C1,8)
    ln_ex8 = jnp.pad(ln_ex4, ((0, 4), (0, 0)))                          # (8,4C1)

    return dict(
        class_num=class_num,
        # fused upscaling params (bf16 MXU operands, f32 VPU params)
        w1_cat=w1_cat.astype(jnp.bfloat16),
        b1_cat=jnp.tile(b1, 4).reshape(1, 4 * C1),
        ln_avg8=ln_avg8.astype(jnp.bfloat16),
        ln_ex8=ln_ex8.astype(jnp.bfloat16),
        ln_w_cat=jnp.tile(ln_w, 4).reshape(1, 4 * C1),
        ln_b_cat=jnp.tile(ln_b, 4).reshape(1, 4 * C1),
        w2_bd=w2_bd.astype(jnp.bfloat16),
        b2_cat=jnp.tile(b2, 16).reshape(1, 16 * C2),
        # hypernetwork MLPs (weights stored transposed: (in, out)); plain XLA
        mlp_w1=nrm(keys[6], (class_num, C, C)),
        mlp_b1=nrm(keys[7], (class_num, 1, C)),
        mlp_w2=nrm(keys[8], (class_num, C, C)),
        mlp_b2=nrm(keys[9], (class_num, 1, C)),
        mlp_w3=nrm(keys[10], (class_num, C, C2)),
        mlp_b3=nrm(keys[11], (class_num, 1, C2)),
        # stand-in transformer projections
        wq=nrm(keys[12], (C, C)),
        wk=nrm(keys[13], (C, C)),
        wv=nrm(keys[14], (C, C)),
        # raw (unfused) f32 weights for the pure-JAX reference check
        raw=dict(w1=w1, b1=b1, ln_w=ln_w, ln_b=ln_b, w2=w2, b2=b2),
    )


if __name__ == "__main__":
    B, C, H, W = 2, 32, 8, 8          # transformer_dim = 32 (SAM uses 256)
    CLASS_NUM = 3
    N_TOK = 4
    DOMAIN_SEQ = 1

    root = jax.random.PRNGKey(0)
    k_src, k_pos, k_tok, k_par = jax.random.split(root, 4)
    src = jax.random.normal(k_src, (B, C, H, W), dtype=jnp.float32)
    pos_src = jax.random.normal(k_pos, (B, C, H, W), dtype=jnp.float32)
    tokens = jax.random.normal(k_tok, (B, N_TOK, C), dtype=jnp.float32)
    params = init_params(k_par, C, CLASS_NUM)

    masks = dq_decoder_forward(src, pos_src, tokens, DOMAIN_SEQ, params)
    masks = jax.block_until_ready(masks)

    assert masks.shape == (B, 1, 4 * H, 4 * W), masks.shape
    assert bool(jnp.all(jnp.isfinite(masks)))

    # Pure-JAX f32 / erf-GELU reference (PyTorch semantics); loose tolerance
    # covers the kernel's intentional bf16 MXU + tanh-GELU inference path.
    ref = dq_decoder_reference(src, pos_src, tokens, DOMAIN_SEQ, params)
    err = float(jnp.max(jnp.abs(masks - ref)))
    scale = float(jnp.max(jnp.abs(ref)))
    assert err <= 3e-2 + 0.15 * scale, (err, scale)

    print("KERNEL_OK")
</pallas_src>

<mosaic_0001>
module attributes {stable_mosaic.version = 11 : i64} {
  func.func @upscale_mask_kernel(%arg0: i32, %arg1: i32, %arg2: memref<1x64x32xbf16, #tpu.memory_space<vmem>>, %arg3: memref<32x32xbf16, #tpu.memory_space<vmem>>, %arg4: memref<1x32xf32, #tpu.memory_space<vmem>>, %arg5: memref<32x8xbf16, #tpu.memory_space<vmem>>, %arg6: memref<8x32xbf16, #tpu.memory_space<vmem>>, %arg7: memref<1x32xf32, #tpu.memory_space<vmem>>, %arg8: memref<1x32xf32, #tpu.memory_space<vmem>>, %arg9: memref<32x64xbf16, #tpu.memory_space<vmem>>, %arg10: memref<1x64xf32, #tpu.memory_space<vmem>>, %arg11: memref<1x64x16xbf16, #tpu.memory_space<vmem>>, %arg12: memref<1x64x16xf32, #tpu.memory_space<vmem>>) attributes {dimension_semantics = [#tpu.dimension_semantics<parallel>, #tpu.dimension_semantics<parallel>], iteration_bounds = array<i64: 2, 1>, scalar_prefetch = 0 : i64, scratch_operands = 0 : i64, tpu.core_type = #tpu.core_type<tc>, window_params = [{transform_indices = @transform_0, window_bounds = array<i64: 1, 64, 32>}, {pipeline_mode = #tpu.pipeline_mode<synchronous>, transform_indices = @transform_1, window_bounds = array<i64: 32, 32>}, {pipeline_mode = #tpu.pipeline_mode<synchronous>, transform_indices = @transform_2, window_bounds = array<i64: 1, 32>}, {pipeline_mode = #tpu.pipeline_mode<synchronous>, transform_indices = @transform_3, window_bounds = array<i64: 32, 8>}, {pipeline_mode = #tpu.pipeline_mode<synchronous>, transform_indices = @transform_4, window_bounds = array<i64: 8, 32>}, {pipeline_mode = #tpu.pipeline_mode<synchronous>, transform_indices = @transform_5, window_bounds = array<i64: 1, 32>}, {pipeline_mode = #tpu.pipeline_mode<synchronous>, transform_indices = @transform_6, window_bounds = array<i64: 1, 32>}, {pipeline_mode = #tpu.pipeline_mode<synchronous>, transform_indices = @transform_7, window_bounds = array<i64: 32, 64>}, {pipeline_mode = #tpu.pipeline_mode<synchronous>, transform_indices = @transform_8, window_bounds = array<i64: 1, 64>}, {transform_indices = @transform_9, window_bounds = array<i64: 1, 64, 16>}, {transform_indices = @transform_10, window_bounds = array<i64: 1, 64, 16>}]} {
    %c0 = arith.constant 0 : index
    %c0_0 = arith.constant 0 : index
    %c0_1 = arith.constant 0 : index
    %0 = vector.load %arg2[%c0, %c0_0, %c0_1] : memref<1x64x32xbf16, #tpu.memory_space<vmem>>, vector<1x64x32xbf16>
    %1 = vector.shape_cast %0 : vector<1x64x32xbf16> to vector<64x32xbf16>
    %c0_2 = arith.constant 0 : index
    %c0_3 = arith.constant 0 : index
    %2 = vector.load %arg3[%c0_2, %c0_3] : memref<32x32xbf16, #tpu.memory_space<vmem>>, vector<32x32xbf16>
    %c0_4 = arith.constant 0 : index
    %c0_5 = arith.constant 0 : index
    %3 = vector.load %arg4[%c0_4, %c0_5] : memref<1x32xf32, #tpu.memory_space<vmem>>, vector<1x32xf32>
    %c0_6 = arith.constant 0 : index
    %c0_7 = arith.constant 0 : index
    %4 = vector.load %arg5[%c0_6, %c0_7] : memref<32x8xbf16, #tpu.memory_space<vmem>>, vector<32x8xbf16>
    %c0_8 = arith.constant 0 : index
    %c0_9 = arith.constant 0 : index
    %5 = vector.load %arg6[%c0_8, %c0_9] : memref<8x32xbf16, #tpu.memory_space<vmem>>, vector<8x32xbf16>
    %c0_10 = arith.constant 0 : index
    %c0_11 = arith.constant 0 : index
    %6 = vector.load %arg7[%c0_10, %c0_11] : memref<1x32xf32, #tpu.memory_space<vmem>>, vector<1x32xf32>
    %c0_12 = arith.constant 0 : index
    %c0_13 = arith.constant 0 : index
    %7 = vector.load %arg8[%c0_12, %c0_13] : memref<1x32xf32, #tpu.memory_space<vmem>>, vector<1x32xf32>
    %c0_14 = arith.constant 0 : index
    %c0_15 = arith.constant 0 : index
    %8 = vector.load %arg9[%c0_14, %c0_15] : memref<32x64xbf16, #tpu.memory_space<vmem>>, vector<32x64xbf16>
    %c0_16 = arith.constant 0 : index
    %c0_17 = arith.constant 0 : index
    %9 = vector.load %arg10[%c0_16, %c0_17] : memref<1x64xf32, #tpu.memory_space<vmem>>, vector<1x64xf32>
    %c0_18 = arith.constant 0 : index
    %c0_19 = arith.constant 0 : index
    %c0_20 = arith.constant 0 : index
    %10 = vector.load %arg11[%c0_18, %c0_19, %c0_20] : memref<1x64x16xbf16, #tpu.memory_space<vmem>>, vector<1x64x16xbf16>
    %11 = vector.shape_cast %10 : vector<1x64x16xbf16> to vector<64x16xbf16>
    %cst = arith.constant dense<0.000000e+00> : vector<64x32xf32>
    %12 = tpu.matmul %1, %2, %cst {dimension_numbers = #tpu.dot_dimension_numbers<[1], [0], [0], [1], [0, 0, 1, 1], [], []>} : vector<64x32xbf16>, vector<32x32xbf16>, vector<64x32xf32> -> vector<64x32xf32>
    %13 = vector.broadcast %3 : vector<1x32xf32> to vector<64x32xf32>
    %14 = arith.addf %12, %13 : vector<64x32xf32>
    %15 = arith.truncf %14 : vector<64x32xf32> to vector<64x32xbf16>
    %cst_21 = arith.constant dense<0.000000e+00> : vector<64x8xf32>
    %16 = tpu.matmul %15, %4, %cst_21 {dimension_numbers = #tpu.dot_dimension_numbers<[1], [0], [0], [1], [0, 0, 1, 1], [], []>} : vector<64x32xbf16>, vector<32x8xbf16>, vector<64x8xf32> -> vector<64x8xf32>
    %17 = arith.truncf %16 : vector<64x8xf32> to vector<64x8xbf16>
    %cst_22 = arith.constant dense<0.000000e+00> : vector<64x32xf32>
    %18 = tpu.matmul %17, %5, %cst_22 {dimension_numbers = #tpu.dot_dimension_numbers<[1], [0], [0], [1], [0, 0, 1, 1], [], []>} : vector<64x8xbf16>, vector<8x32xbf16>, vector<64x32xf32> -> vector<64x32xf32>
    %19 = arith.subf %14, %18 : vector<64x32xf32>
    %20 = arith.mulf %19, %19 : vector<64x32xf32>
    %21 = arith.truncf %20 : vector<64x32xf32> to vector<64x32xbf16>
    %cst_23 = arith.constant dense<0.000000e+00> : vector<64x8xf32>
    %22 = tpu.matmul %21, %4, %cst_23 {dimension_numbers = #tpu.dot_dimension_numbers<[1], [0], [0], [1], [0, 0, 1, 1], [], []>} : vector<64x32xbf16>, vector<32x8xbf16>, vector<64x8xf32> -> vector<64x8xf32>
    %cst_24 = arith.constant 9.99999997E-7 : f32
    %23 = vector.broadcast %cst_24 : f32 to vector<64x8xf32>
    %24 = arith.addf %22, %23 : vector<64x8xf32>
    %25 = math.rsqrt %24 : vector<64x8xf32>
    %26 = arith.truncf %25 : vector<64x8xf32> to vector<64x8xbf16>
    %cst_25 = arith.constant dense<0.000000e+00> : vector<64x32xf32>
    %27 = tpu.matmul %26, %5, %cst_25 {dimension_numbers = #tpu.dot_dimension_numbers<[1], [0], [0], [1], [0, 0, 1, 1], [], []>} : vector<64x8xbf16>, vector<8x32xbf16>, vector<64x32xf32> -> vector<64x32xf32>
    %28 = vector.broadcast %6 : vector<1x32xf32> to vector<64x32xf32>
    %29 = arith.mulf %27, %28 : vector<64x32xf32>
    %30 = arith.mulf %19, %29 : vector<64x32xf32>
    %31 = vector.broadcast %7 : vector<1x32xf32> to vector<64x32xf32>
    %32 = arith.addf %30, %31 : vector<64x32xf32>
    %33 = arith.truncf %32 : vector<64x32xf32> to vector<64x32xbf16>
    %cst_26 = arith.constant 5.000000e-01 : bf16
    %34 = vector.broadcast %cst_26 : bf16 to vector<64x32xbf16>
    %35 = arith.mulf %34, %33 : vector<64x32xbf16>
    %cst_27 = arith.constant 4.467770e-02 : bf16
    %36 = vector.broadcast %cst_27 : bf16 to vector<64x32xbf16>
    %37 = arith.mulf %36, %33 : vector<64x32xbf16>
    %38 = arith.mulf %37, %33 : vector<64x32xbf16>
    %39 = arith.mulf %38, %33 : vector<64x32xbf16>
    %40 = arith.addf %33, %39 : vector<64x32xbf16>
    %cst_28 = arith.constant 7.968750e-01 : bf16
    %41 = vector.broadcast %cst_28 : bf16 to vector<64x32xbf16>
    %42 = arith.mulf %41, %40 : vector<64x32xbf16>
    %43 = math.tanh %42 : vector<64x32xbf16>
    %cst_29 = arith.constant 1.000000e+00 : bf16
    %44 = vector.broadcast %cst_29 : bf16 to vector<64x32xbf16>
    %45 = arith.addf %44, %43 : vector<64x32xbf16>
    %46 = arith.mulf %35, %45 : vector<64x32xbf16>
    %cst_30 = arith.constant dense<0.000000e+00> : vector<64x64xf32>
    %47 = tpu.matmul %46, %8, %cst_30 {dimension_numbers = #tpu.dot_dimension_numbers<[1], [0], [0], [1], [0, 0, 1, 1], [], []>} : vector<64x32xbf16>, vector<32x64xbf16>, vector<64x64xf32> -> vector<64x64xf32>
    %48 = vector.broadcast %9 : vector<1x64xf32> to vector<64x64xf32>
    %49 = arith.addf %47, %48 : vector<64x64xf32>
    %50 = arith.truncf %49 : vector<64x64xf32> to vector<64x64xbf16>
    %cst_31 = arith.constant 5.000000e-01 : bf16
    %51 = vector.broadcast %cst_31 : bf16 to vector<64x64xbf16>
    %52 = arith.mulf %51, %50 : vector<64x64xbf16>
    %cst_32 = arith.constant 4.467770e-02 : bf16
    %53 = vector.broadcast %cst_32 : bf16 to vector<64x64xbf16>
    %54 = arith.mulf %53, %50 : vector<64x64xbf16>
    %55 = arith.mulf %54, %50 : vector<64x64xbf16>
    %56 = arith.mulf %55, %50 : vector<64x64xbf16>
    %57 = arith.addf %50, %56 : vector<64x64xbf16>
    %cst_33 = arith.constant 7.968750e-01 : bf16
    %58 = vector.broadcast %cst_33 : bf16 to vector<64x64xbf16>
    %59 = arith.mulf %58, %57 : vector<64x64xbf16>
    %60 = math.tanh %59 : vector<64x64xbf16>
    %cst_34 = arith.constant 1.000000e+00 : bf16
    %61 = vector.broadcast %cst_34 : bf16 to vector<64x64xbf16>
    %62 = arith.addf %61, %60 : vector<64x64xbf16>
    %63 = arith.mulf %52, %62 : vector<64x64xbf16>
    %cst_35 = arith.constant dense<0.000000e+00> : vector<64x16xf32>
    %64 = tpu.matmul %63, %11, %cst_35 {dimension_numbers = #tpu.dot_dimension_numbers<[1], [0], [0], [1], [0, 0, 1, 1], [], []>} : vector<64x64xbf16>, vector<64x16xbf16>, vector<64x16xf32> -> vector<64x16xf32>
    %c0_36 = arith.constant 0 : index
    %c0_37 = arith.constant 0 : index
    %c0_38 = arith.constant 0 : index
    %65 = vector.load %arg12[%c0_36, %c0_37, %c0_38] : memref<1x64x16xf32, #tpu.memory_space<vmem>>, vector<1x64x16xf32>
    %66 = vector.shape_cast %65 : vector<1x64x16xf32> to vector<64x16xf32>
    %67 = vector.shape_cast %64 : vector<64x16xf32> to vector<1x64x16xf32>
    tpu.vector_store %arg12[%c0_36, %c0_37, %c0_38], %67 {strides = array<i32>} : memref<1x64x16xf32, #tpu.memory_space<vmem>>, vector<1x64x16xf32>,
    return
  }
  func.func @transform_0(%arg0: i32, %arg1: i32) -> (i32, i32, i32) {
    %c0_i32 = arith.constant 0 : i32
    %c0_i32_0 = arith.constant 0 : i32
    return %arg0, %arg1, %c0_i32 : i32, i32, i32
  }
  func.func @transform_1(%arg0: i32, %arg1: i32) -> (i32, i32) {
    %c0_i32 = arith.constant 0 : i32
    %c0_i32_0 = arith.constant 0 : i32
    %c0_i32_1 = arith.constant 0 : i32
    return %c0_i32, %c0_i32_0 : i32, i32
  }
  func.func @transform_2(%arg0: i32, %arg1: i32) -> (i32, i32) {
    %c0_i32 = arith.constant 0 : i32
    %c0_i32_0 = arith.constant 0 : i32
    %c0_i32_1 = arith.constant 0 : i32
    return %c0_i32, %c0_i32_0 : i32, i32
  }
  func.func @transform_3(%arg0: i32, %arg1: i32) -> (i32, i32) {
    %c0_i32 = arith.constant 0 : i32
    %c0_i32_0 = arith.constant 0 : i32
    %c0_i32_1 = arith.constant 0 : i32
    return %c0_i32, %c0_i32_0 : i32, i32
  }
  func.func @transform_4(%arg0: i32, %arg1: i32) -> (i32, i32) {
    %c0_i32 = arith.constant 0 : i32
    %c0_i32_0 = arith.constant 0 : i32
    %c0_i32_1 = arith.constant 0 : i32
    return %c0_i32, %c0_i32_0 : i32, i32
  }
  func.func @transform_5(%arg0: i32, %arg1: i32) -> (i32, i32) {
    %c0_i32 = arith.constant 0 : i32
    %c0_i32_0 = arith.constant 0 : i32
    %c0_i32_1 = arith.constant 0 : i32
    return %c0_i32, %c0_i32_0 : i32, i32
  }
  func.func @transform_6(%arg0: i32, %arg1: i32) -> (i32, i32) {
    %c0_i32 = arith.constant 0 : i32
    %c0_i32_0 = arith.constant 0 : i32
    %c0_i32_1 = arith.constant 0 : i32
    return %c0_i32, %c0_i32_0 : i32, i32
  }
  func.func @transform_7(%arg0: i32, %arg1: i32) -> (i32, i32) {
    %c0_i32 = arith.constant 0 : i32
    %c0_i32_0 = arith.constant 0 : i32
    %c0_i32_1 = arith.constant 0 : i32
    return %c0_i32, %c0_i32_0 : i32, i32
  }
  func.func @transform_8(%arg0: i32, %arg1: i32) -> (i32, i32) {
    %c0_i32 = arith.constant 0 : i32
    %c0_i32_0 = arith.constant 0 : i32
    %c0_i32_1 = arith.constant 0 : i32
    return %c0_i32, %c0_i32_0 : i32, i32
  }
  func.func @transform_9(%arg0: i32, %arg1: i32) -> (i32, i32, i32) {
    %c0_i32 = arith.constant 0 : i32
    %c0_i32_0 = arith.constant 0 : i32
    %c0_i32_1 = arith.constant 0 : i32
    return %arg0, %c0_i32, %c0_i32_0 : i32, i32, i32
  }
  func.func @transform_10(%arg0: i32, %arg1: i32) -> (i32, i32, i32) {
    %c0_i32 = arith.constant 0 : i32
    %c0_i32_0 = arith.constant 0 : i32
    return %arg0, %arg1, %c0_i32 : i32, i32, i32
  }
}

</mosaic_0001>

<llo_original>
// kernel: tpu_custom_call.1
$region0: #{tpu_custom_call.1}
  #allocation0 [shape = 'u32[]', space=smem, size = 0x4, offset = 0x4, fixed_abs, tag = 'smem constant byte address 0x4 - core index']
  #allocation1 [shape = 'u32[144,128]{1,0:T(1,128)}', space=vmem, size = 0x12000, scoped, tag = 'internal scratch']
  %s0 = inlined_call_operand.vmem [shape: bf16[2,64,32], index: 0, kind: input, shape index: {}]
  %s1 = inlined_call_operand.vmem [shape: bf16[32,32], index: 1, kind: input, shape index: {}]
  %s2 = inlined_call_operand.vmem [shape: f32[1,32], index: 2, kind: input, shape index: {}]
  %s3 = inlined_call_operand.vmem [shape: bf16[32,8], index: 3, kind: input, shape index: {}]
  %s4 = inlined_call_operand.vmem [shape: bf16[8,32], index: 4, kind: input, shape index: {}]
  %s5 = inlined_call_operand.vmem [shape: f32[1,32], index: 5, kind: input, shape index: {}]
  %s6 = inlined_call_operand.vmem [shape: f32[1,32], index: 6, kind: input, shape index: {}]
  %s7 = inlined_call_operand.vmem [shape: bf16[32,64], index: 7, kind: input, shape index: {}]
  %s8 = inlined_call_operand.vmem [shape: f32[1,64], index: 8, kind: input, shape index: {}]
  %s9 = inlined_call_operand.vmem [shape: bf16[2,64,16], index: 9, kind: input, shape index: {}]
  %s10 = inlined_call_operand.vmem [shape: f32[2,64,16], index: 10, kind: output, shape index: {}]
  %s11 = sld [smem:[#allocation0]]
  $region73: #{tpu_custom_call.1} parent=0
    _
  %s13 = ssub.s32 1, %s11
  %s14 = scalar_select 0, %s13, %s11
  loop: start=0, step=1, limit=4
  $region2: #{tpu_custom_call.1} parent=0 // loop_pre_header
    _
  $region3: #{tpu_custom_call.1} parent=0 // loop_header
    %s16 = sphi 0, %s20
    %p17 = scmp.ge.s32.totalorder %s16, 4
    %s23 = sphi 0, %s35
    %s24 = sphi 0, %s31
    %s25 = sphi 0, %s23
    %s26 = sphi 0, %s24
    %s27 = sphi 0, %s25
    %s28 = sphi 0, %s26
    %s40 = sphi 0, %s42
    %s43 = sphi 0, %s40
    %s44 = sphi 0, %s43
    %s60 = sphi 0, %s44
    %s64 = sphi 0, %s64
    %s66 = sphi 0, %s64
    %s67 = sphi 0, %s66
    %s81 = sphi 0, %s67
    %s85 = sphi 0, %s85
    %s87 = sphi 0, %s85
    %s88 = sphi 0, %s87
    %s102 = sphi 0, %s88
    %s106 = sphi 0, %s106
    %s108 = sphi 0, %s106
    %s109 = sphi 0, %s108
    %s123 = sphi 0, %s109
    %s127 = sphi 0, %s127
    %s129 = sphi 0, %s127
    %s130 = sphi 0, %s129
    %s144 = sphi 0, %s130
    %s148 = sphi 0, %s148
    %s150 = sphi 0, %s148
    %s151 = sphi 0, %s150
    %s165 = sphi 0, %s151
    %s169 = sphi 0, %s169
    %s171 = sphi 0, %s169
    %s172 = sphi 0, %s171
    %s186 = sphi 0, %s172
    %s190 = sphi 0, %s190
    %s192 = sphi 0, %s190
    %s193 = sphi 0, %s192
    %s207 = sphi 0, %s193
    %s211 = sphi 0, %s211
    %s213 = sphi 0, %s211
    %s214 = sphi 0, %s213
    %s228 = sphi 0, %s214
    %s234 = sphi 0, %s236
    %s237 = sphi 0, %s234
    %s238 = sphi 0, %s237
    %s254 = sphi 0, %s238
    %s262 = sphi 0, %s264
    %s265 = sphi 0, %s262
    %s266 = sphi 0, %s265
    %s282 = sphi 0, %s266
  $region4: #{tpu_custom_call.1} parent=0 // loop_header_branch
    %19 = sbr.rel (%p17) target = $region8
  $region5: #{tpu_custom_call.1} parent=0 // loop_body
    %s21 = ssub.s32 %s16, 1
    %s22 = ssub.s32 %s16, 2
    %s29 = sadd.s32 1, %s24
    %p30 = scmp.ge.s32.totalorder %s29, 1
    %s31 = scalar_select %p30, 0, %s29
    %s32 = sadd.s32 1, %s23
    %s33 = scalar_select %p30, %s32, %s23
    %p34 = scmp.ge.s32.totalorder %s33, 2
    %s35 = scalar_select %p34, 0, %s33
    %s36 = ssub.s32 %s23, %s35
    %s37 = ssub.s32 %s24, %s31
    %s38 = sor.u32 %s36, %s37
    %p39 = scmp.eq.s32.totalorder %s38, 0
    %s41 = sadd.s32 %s40, 1
    %s42 = scalar_select %p39, %s40, %s41
    %p45 = pneg %p39
    %p46 = scmp.eq.s32.totalorder %s16, 1
    %p47 = por %p45, %p46
    %p48 = scmp.ne.s32.totalorder %s40, %s43
    %p49 = scmp.eq.s32.totalorder %s16, 0
    %p50 = por %p48, %p49
    %p51 = scmp.ne.s32.totalorder %s40, %s43
    %p52 = scmp.eq.s32.totalorder %s21, 1
    %p53 = por %p51, %p52
    %p54 = scmp.ne.s32.totalorder %s43, %s44
    %p55 = scmp.eq.s32.totalorder %s21, 0
    %p56 = por %p54, %p55
    %p57 = scmp.ne.s32.totalorder %s43, %s44
    %p58 = scmp.eq.s32.totalorder %s22, 1
    %p59 = por %p57, %p58
    %p61 = scmp.ne.s32.totalorder %s44, %s60
    %p62 = scmp.eq.s32.totalorder %s22, 0
    %p63 = por %p61, %p62
    %s65 = sadd.s32 %s64, 1
    %p68 = scmp.eq.s32.totalorder %s16, 1
    %p69 = scmp.ne.s32.totalorder %s64, %s66
    %p70 = scmp.eq.s32.totalorder %s16, 0
    %p71 = por %p69, %p70
    %p72 = scmp.ne.s32.totalorder %s64, %s66
    %p73 = scmp.eq.s32.totalorder %s21, 1
    %p74 = por %p72, %p73
    %p75 = scmp.ne.s32.totalorder %s66, %s67
    %p76 = scmp.eq.s32.totalorder %s21, 0
    %p77 = por %p75, %p76
    %p78 = scmp.ne.s32.totalorder %s66, %s67
    %p79 = scmp.eq.s32.totalorder %s22, 1
    %p80 = por %p78, %p79
    %p82 = scmp.ne.s32.totalorder %s67, %s81
    %p83 = scmp.eq.s32.totalorder %s22, 0
    %p84 = por %p82, %p83
    %s86 = sadd.s32 %s85, 1
    %p89 = scmp.eq.s32.totalorder %s16, 1
    %p90 = scmp.ne.s32.totalorder %s85, %s87
    %p91 = scmp.eq.s32.totalorder %s16, 0
    %p92 = por %p90, %p91
    %p93 = scmp.ne.s32.totalorder %s85, %s87
    %p94 = scmp.eq.s32.totalorder %s21, 1
    %p95 = por %p93, %p94
    %p96 = scmp.ne.s32.totalorder %s87, %s88
    %p97 = scmp.eq.s32.totalorder %s21, 0
    %p98 = por %p96, %p97
    %p99 = scmp.ne.s32.totalorder %s87, %s88
    %p100 = scmp.eq.s32.totalorder %s22, 1
    %p101 = por %p99, %p100
    %p103 = scmp.ne.s32.totalorder %s88, %s102
    %p104 = scmp.eq.s32.totalorder %s22, 0
    %p105 = por %p103, %p104
    %s107 = sadd.s32 %s106, 1
    %p110 = scmp.eq.s32.totalorder %s16, 1
    %p111 = scmp.ne.s32.totalorder %s106, %s108
    %p112 = scmp.eq.s32.totalorder %s16, 0
    %p113 = por %p111, %p112
    %p114 = scmp.ne.s32.totalorder %s106, %s108
    %p115 = scmp.eq.s32.totalorder %s21, 1
    %p116 = por %p114, %p115
    %p117 = scmp.ne.s32.totalorder %s108, %s109
    %p118 = scmp.eq.s32.totalorder %s21, 0
    %p119 = por %p117, %p118
    %p120 = scmp.ne.s32.totalorder %s108, %s109
    %p121 = scmp.eq.s32.totalorder %s22, 1
    %p122 = por %p120, %p121
    %p124 = scmp.ne.s32.totalorder %s109, %s123
    %p125 = scmp.eq.s32.totalorder %s22, 0
    %p126 = por %p124, %p125
    %s128 = sadd.s32 %s127, 1
    %p131 = scmp.eq.s32.totalorder %s16, 1
    %p132 = scmp.ne.s32.totalorder %s127, %s129
    %p133 = scmp.eq.s32.totalorder %s16, 0
    %p134 = por %p132, %p133
    %p135 = scmp.ne.s32.totalorder %s127, %s129
    %p136 = scmp.eq.s32.totalorder %s21, 1
    %p137 = por %p135, %p136
    %p138 = scmp.ne.s32.totalorder %s129, %s130
    %p139 = scmp.eq.s32.totalorder %s21, 0
    %p140 = por %p138, %p139
    %p141 = scmp.ne.s32.totalorder %s129, %s130
    %p142 = scmp.eq.s32.totalorder %s22, 1
    %p143 = por %p141, %p142
    %p145 = scmp.ne.s32.totalorder %s130, %s144
    %p146 = scmp.eq.s32.totalorder %s22, 0
    %p147 = por %p145, %p146
    %s149 = sadd.s32 %s148, 1
    %p152 = scmp.eq.s32.totalorder %s16, 1
    %p153 = scmp.ne.s32.totalorder %s148, %s150
    %p154 = scmp.eq.s32.totalorder %s16, 0
    %p155 = por %p153, %p154
    %p156 = scmp.ne.s32.totalorder %s148, %s150
    %p157 = scmp.eq.s32.totalorder %s21, 1
    %p158 = por %p156, %p157
    %p159 = scmp.ne.s32.totalorder %s150, %s151
    %p160 = scmp.eq.s32.totalorder %s21, 0
    %p161 = por %p159, %p160
    %p162 = scmp.ne.s32.totalorder %s150, %s151
    %p163 = scmp.eq.s32.totalorder %s22, 1
    %p164 = por %p162, %p163
    %p166 = scmp.ne.s32.totalorder %s151, %s165
    %p167 = scmp.eq.s32.totalorder %s22, 0
    %p168 = por %p166, %p167
    %s170 = sadd.s32 %s169, 1
    %p173 = scmp.eq.s32.totalorder %s16, 1
    %p174 = scmp.ne.s32.totalorder %s169, %s171
    %p175 = scmp.eq.s32.totalorder %s16, 0
    %p176 = por %p174, %p175
    %p177 = scmp.ne.s32.totalorder %s169, %s171
    %p178 = scmp.eq.s32.totalorder %s21, 1
    %p179 = por %p177, %p178
    %p180 = scmp.ne.s32.totalorder %s171, %s172
    %p181 = scmp.eq.s32.totalorder %s21, 0
    %p182 = por %p180, %p181
    %p183 = scmp.ne.s32.totalorder %s171, %s172
    %p184 = scmp.eq.s32.totalorder %s22, 1
    %p185 = por %p183, %p184
    %p187 = scmp.ne.s32.totalorder %s172, %s186
    %p188 = scmp.eq.s32.totalorder %s22, 0
    %p189 = por %p187, %p188
    %s191 = sadd.s32 %s190, 1
    %p194 = scmp.eq.s32.totalorder %s16, 1
    %p195 = scmp.ne.s32.totalorder %s190, %s192
    %p196 = scmp.eq.s32.totalorder %s16, 0
    %p197 = por %p195, %p196
    %p198 = scmp.ne.s32.totalorder %s190, %s192
    %p199 = scmp.eq.s32.totalorder %s21, 1
    %p200 = por %p198, %p199
    %p201 = scmp.ne.s32.totalorder %s192, %s193
    %p202 = scmp.eq.s32.totalorder %s21, 0
    %p203 = por %p201, %p202
    %p204 = scmp.ne.s32.totalorder %s192, %s193
    %p205 = scmp.eq.s32.totalorder %s22, 1
    %p206 = por %p204, %p205
    %p208 = scmp.ne.s32.totalorder %s193, %s207
    %p209 = scmp.eq.s32.totalorder %s22, 0
    %p210 = por %p208, %p209
    %s212 = sadd.s32 %s211, 1
    %p215 = scmp.eq.s32.totalorder %s16, 1
    %p216 = scmp.ne.s32.totalorder %s211, %s213
    %p217 = scmp.eq.s32.totalorder %s16, 0
    %p218 = por %p216, %p217
    %p219 = scmp.ne.s32.totalorder %s211, %s213
    %p220 = scmp.eq.s32.totalorder %s21, 1
    %p221 = por %p219, %p220
    %p222 = scmp.ne.s32.totalorder %s213, %s214
    %p223 = scmp.eq.s32.totalorder %s21, 0
    %p224 = por %p222, %p223
    %p225 = scmp.ne.s32.totalorder %s213, %s214
    %p226 = scmp.eq.s32.totalorder %s22, 1
    %p227 = por %p225, %p226
    %p229 = scmp.ne.s32.totalorder %s214, %s228
    %p230 = scmp.eq.s32.totalorder %s22, 0
    %p231 = por %p229, %p230
    %s232 = ssub.s32 %s23, %s35
    %p233 = scmp.eq.s32.totalorder %s232, 0
    %s235 = sadd.s32 %s234, 1
    %s236 = scalar_select %p233, %s234, %s235
    %p239 = pneg %p233
    %p240 = scmp.eq.s32.totalorder %s16, 1
    %p241 = por %p239, %p240
    %p242 = scmp.ne.s32.totalorder %s234, %s237
    %p243 = scmp.eq.s32.totalorder %s16, 0
    %p244 = por %p242, %p243
    %p245 = scmp.ne.s32.totalorder %s234, %s237
    %p246 = scmp.eq.s32.totalorder %s21, 1
    %p247 = por %p245, %p246
    %p248 = scmp.ne.s32.totalorder %s237, %s238
    %p249 = scmp.eq.s32.totalorder %s21, 0
    %p250 = por %p248, %p249
    %p251 = scmp.ne.s32.totalorder %s237, %s238
    %p252 = scmp.eq.s32.totalorder %s22, 1
    %p253 = por %p251, %p252
    %p255 = scmp.ne.s32.totalorder %s238, %s254
    %p256 = scmp.eq.s32.totalorder %s22, 0
    %p257 = por %p255, %p256
    %s258 = ssub.s32 %s23, %s35
    %s259 = ssub.s32 %s24, %s31
    %s260 = sor.u32 %s258, %s259
    %p261 = scmp.eq.s32.totalorder %s260, 0
    %s263 = sadd.s32 %s262, 1
    %s264 = scalar_select %p261, %s262, %s263
    %p267 = pneg %p261
    %p268 = scmp.eq.s32.totalorder %s16, 1
    %p269 = por %p267, %p268
    %p270 = scmp.ne.s32.totalorder %s262, %s265
    %p271 = scmp.eq.s32.totalorder %s16, 0
    %p272 = por %p270, %p271
    %p273 = scmp.ne.s32.totalorder %s262, %s265
    %p274 = scmp.eq.s32.totalorder %s21, 1
    %p275 = por %p273, %p274
    %p276 = scmp.ne.s32.totalorder %s265, %s266
    %p277 = scmp.eq.s32.totalorder %s21, 0
    %p278 = por %p276, %p277
    %p279 = scmp.ne.s32.totalorder %s265, %s266
    %p280 = scmp.eq.s32.totalorder %s22, 1
    %p281 = por %p279, %p280
    %p283 = scmp.ne.s32.totalorder %s266, %s282
    %p284 = scmp.eq.s32.totalorder %s22, 0
    %p285 = por %p283, %p284
    %p286 = scmp.le.s32.totalorder 1, %s16
    %p287 = scmp.lt.s32.totalorder %s16, 3
    %p288 = pnand %p286, %p287
    %p289 = pneg %p288
    // Predicated region
    $region9: #{tpu_custom_call.1} parent=5 // pred_check
      _
    $region10: #{tpu_custom_call.1} parent=5 // pred_check_branch
      %291 = sbr.rel (%p288) target = $region12
    $region11: #{tpu_custom_call.1} parent=5 // pred_region
      %s292 = ssub.s32 %s16, 1
      // Predicated region
      $region13: #{tpu_custom_call.1} parent=11 // pred_check
        %p293 = pneg %p77
      $region14: #{tpu_custom_call.1} parent=11 // pred_check_branch
        %295 = sbr.rel (%p293) target = $region16
      $region15: #{tpu_custom_call.1} parent=11 // pred_region
        _
      $region16: #{tpu_custom_call.1} parent=11 // pred_fallthru
        _
      // Predicated region
      $region17: #{tpu_custom_call.1} parent=11 // pred_check
        %p296 = pneg %p98
      $region18: #{tpu_custom_call.1} parent=11 // pred_check_branch
        %298 = sbr.rel (%p296) target = $region20
      $region19: #{tpu_custom_call.1} parent=11 // pred_region
        _
      $region20: #{tpu_custom_call.1} parent=11 // pred_fallthru
        _
      // Predicated region
      $region21: #{tpu_custom_call.1} parent=11 // pred_check
        %p299 = pneg %p119
      $region22: #{tpu_custom_call.1} parent=11 // pred_check_branch
        %301 = sbr.rel (%p299) target = $region24
      $region23: #{tpu_custom_call.1} parent=11 // pred_region
        _
      $region24: #{tpu_custom_call.1} parent=11 // pred_fallthru
        _
      // Predicated region
      $region25: #{tpu_custom_call.1} parent=11 // pred_check
        %p302 = pneg %p140
      $region26: #{tpu_custom_call.1} parent=11 // pred_check_branch
        %304 = sbr.rel (%p302) target = $region28
      $region27: #{tpu_custom_call.1} parent=11 // pred_region
        _
      $region28: #{tpu_custom_call.1} parent=11 // pred_fallthru
        _
      // Predicated region
      $region29: #{tpu_custom_call.1} parent=11 // pred_check
        %p305 = pneg %p161
      $region30: #{tpu_custom_call.1} parent=11 // pred_check_branch
        %307 = sbr.rel (%p305) target = $region32
      $region31: #{tpu_custom_call.1} parent=11 // pred_region
        _
      $region32: #{tpu_custom_call.1} parent=11 // pred_fallthru
        _
      // Predicated region
      $region33: #{tpu_custom_call.1} parent=11 // pred_check
        %p308 = pneg %p182
      $region34: #{tpu_custom_call.1} parent=11 // pred_check_branch
        %310 = sbr.rel (%p308) target = $region36
      $region35: #{tpu_custom_call.1} parent=11 // pred_region
        _
      $region36: #{tpu_custom_call.1} parent=11 // pred_fallthru
        _
      // Predicated region
      $region37: #{tpu_custom_call.1} parent=11 // pred_check
        %p311 = pneg %p203
      $region38: #{tpu_custom_call.1} parent=11 // pred_check_branch
        %313 = sbr.rel (%p311) target = $region40
      $region39: #{tpu_custom_call.1} parent=11 // pred_region
        _
      $region40: #{tpu_custom_call.1} parent=11 // pred_fallthru
        _
      // Predicated region
      $region41: #{tpu_custom_call.1} parent=11 // pred_check
        %p314 = pneg %p224
      $region42: #{tpu_custom_call.1} parent=11 // pred_check_branch
        %316 = sbr.rel (%p314) target = $region44
      $region43: #{tpu_custom_call.1} parent=11 // pred_region
        _
      $region44: #{tpu_custom_call.1} parent=11 // pred_fallthru
        _
    $region12: #{tpu_custom_call.1} parent=5 // pred_fallthru
      _
    %p317 = scmp.lt.s32.totalorder %s16, 2
    // Predicated region
    $region45: #{tpu_custom_call.1} parent=5 // pred_check
      %p318 = pneg %p317
    $region46: #{tpu_custom_call.1} parent=5 // pred_check_branch
      %320 = sbr.rel (%p318) target = $region48
    $region47: #{tpu_custom_call.1} parent=5 // pred_region
      // Predicated region
      $region49: #{tpu_custom_call.1} parent=47 // pred_check
        %p321 = pneg %p50
      $region50: #{tpu_custom_call.1} parent=47 // pred_check_branch
        %323 = sbr.rel (%p321) target = $region52
      $region51: #{tpu_custom_call.1} parent=47 // pred_region
        %s324 = smul.u32 8, %s24
        %p325 = scmp.lt.s32.totalorder %s23, 1
        %s326 = scalar_select %p325, %s23, 1
        %p327 = scmp.lt.s32.totalorder %s324, 7
        %s328 = scalar_select %p327, %s324, 7
        %s329 = smul.addr %s326, 8
        %s330 = sadd.s32 %s328, %s329
        %s331 = smul.addr %s330, 4
        %s332 = scalar_lea.vmem %s0, %s331
        %s333 = smul.u32 8, %s24
      $region52: #{tpu_custom_call.1} parent=47 // pred_fallthru
        _
      // Predicated region
      $region53: #{tpu_custom_call.1} parent=47 // pred_check
        %p334 = pneg %p244
      $region54: #{tpu_custom_call.1} parent=47 // pred_check_branch
        %336 = sbr.rel (%p334) target = $region56
      $region55: #{tpu_custom_call.1} parent=47 // pred_region
        %p337 = scmp.lt.s32.totalorder %s23, 1
        %s338 = scalar_select %p337, %s23, 1
        %s339 = smul.addr %s338, 8
        %s340 = smul.addr %s339, 4
        %s341 = scalar_lea.vmem %s9, %s340
      $region56: #{tpu_custom_call.1} parent=47 // pred_fallthru
        _
    $region48: #{tpu_custom_call.1} parent=5 // pred_fallthru
      _
    %p342 = scmp.le.s32.totalorder 1, %s16
    %p343 = scmp.lt.s32.totalorder %s16, 3
    %p344 = pnand %p342, %p343
    %p345 = pneg %p344
    // Predicated region
    $region57: #{tpu_custom_call.1} parent=5 // pred_check
      _
    $region58: #{tpu_custom_call.1} parent=5 // pred_check_branch
      %347 = sbr.rel (%p344) target = $region60
    $region59: #{tpu_custom_call.1} parent=5 // pred_region
      %s348 = ssub.s32 %s16, 1
      %s349 = smul.u32 8, %s26
      %p350 = scmp.lt.s32.totalorder %s25, 1
      %s351 = scalar_select %p350, %s25, 1
      %p352 = scmp.lt.s32.totalorder %s349, 7
      %s353 = scalar_select %p352, %s349, 7
      %s354 = smul.addr %s351, 8
      %s355 = sadd.s32 %s353, %s354
      %s356 = smul.addr %s355, 4
      %s357 = scalar_lea.vmem %s0, %s356
      %p358 = pneg %p56
      %p359 = pneg %p53
      %p360 = pneg %p77
      %p361 = pneg %p74
      %p362 = pneg %p98
      %p363 = pneg %p95
      %p364 = pneg %p119
      %p365 = pneg %p116
      %p366 = pneg %p140
      %p367 = pneg %p137
      %p368 = pneg %p161
      %p369 = pneg %p158
      %p370 = pneg %p182
      %p371 = pneg %p179
      %p372 = pneg %p203
      %p373 = pneg %p200
      %p374 = pneg %p224
      %p375 = pneg %p221
      %p376 = scmp.lt.s32.totalorder %s25, 1
      %s377 = scalar_select %p376, %s25, 1
      %s378 = smul.addr %s377, 8
      %s379 = smul.addr %s378, 4
      %s380 = scalar_lea.vmem %s9, %s379
      %p381 = pneg %p250
      %p382 = pneg %p247
      %p383 = pneg %p278
      %p384 = pneg %p275
      %s385 = smul.u32 8, %s26
      %p386 = scmp.lt.s32.totalorder %s25, 1
      %s387 = scalar_select %p386, %s25, 1
      %p388 = scmp.lt.s32.totalorder %s385, 7
      %s389 = scalar_select %p388, %s385, 7
      %s390 = smul.addr %s387, 8
      %s391 = sadd.s32 %s389, %s390
      %s392 = smul.addr %s391, 8
      %s393 = scalar_lea.vmem %s10, %s392
      %s394 = smul.u32 8, %s26
      %p395 = scmp.lt.s32.totalorder %s25, 1
      %s396 = scalar_select %p395, %s25, 1
      %p397 = scmp.lt.s32.totalorder %s394, 7
      %s398 = scalar_select %p397, %s394, 7
      %s399 = smul.addr %s396, 8
      %s400 = sadd.s32 %s398, %s399
      %s401 = smul.addr %s400, 4
      %s402 = scalar_lea.vmem %s0, %s401
      %s403 = smul.u32 8, %s26
      %p404 = scmp.lt.s32.totalorder %s25, 1
      %s405 = scalar_select %p404, %s25, 1
      %s406 = smul.addr %s405, 8
      %s407 = smul.addr %s406, 4
      %s408 = scalar_lea.vmem %s9, %s407
      %s409 = smul.u32 8, %s26
      %p410 = scmp.lt.s32.totalorder %s25, 1
      %s411 = scalar_select %p410, %s25, 1
      %p412 = scmp.lt.s32.totalorder %s409, 7
      %s413 = scalar_select %p412, %s409, 7
      %s414 = smul.addr %s411, 8
      %s415 = sadd.s32 %s413, %s414
      %s416 = smul.addr %s415, 8
      %s417 = scalar_lea.vmem %s10, %s416
      %s418 = smul.u32 8, %s26
      %v424 = vld [vmem:[%s402] sm:$0xf]
      %v425 = vld [vmem:[%s402 + $0x4] sm:$0xf]
      %v426 = vld [vmem:[%s402 + $0x8] sm:$0xf]
      %v427 = vld [vmem:[%s402 + $0xc] sm:$0xf]
      %v428 = vld [vmem:[%s402 + $0x10] sm:$0xf]
      %v429 = vld [vmem:[%s402 + $0x14] sm:$0xf]
      %v430 = vld [vmem:[%s402 + $0x18] sm:$0xf]
      %v431 = vld [vmem:[%s402 + $0x1c] sm:$0xf]
      %v432 = vld [vmem:[%s1] sm:$0xf]
      %v433 = vld [vmem:[%s1 + $0x4] sm:$0xf]
      %v434 = vld [vmem:[%s1 + $0x8] sm:$0xf]
      %v435 = vld [vmem:[%s1 + $0xc] sm:$0xf]
      %v436 = vld [vmem:[%s2] sm:$0x1]
      %v437 = vld [vmem:[%s3] sm:$0xf]
      %v438 = vld [vmem:[%s3 + $0x4] sm:$0xf]
      %v439 = vld [vmem:[%s3 + $0x8] sm:$0xf]
      %v440 = vld [vmem:[%s3 + $0xc] sm:$0xf]
      %v441 = vld [vmem:[%s4] sm:$0xf]
      %v442 = vld [vmem:[%s5] sm:$0x1]
      %v443 = vld [vmem:[%s6] sm:$0x1]
      %v444 = vld [vmem:[%s7] sm:$0xf]
      %v445 = vld [vmem:[%s7 + $0x4] sm:$0xf]
      %v446 = vld [vmem:[%s7 + $0x8] sm:$0xf]
      %v447 = vld [vmem:[%s7 + $0xc] sm:$0xf]
      %v448 = vld [vmem:[%s8] sm:$0x1]
      %v449 = vld [vmem:[%s408] sm:$0xf]
      %v450 = vld [vmem:[%s408 + $0x4] sm:$0xf]
      %v451 = vld [vmem:[%s408 + $0x8] sm:$0xf]
      %v452 = vld [vmem:[%s408 + $0xc] sm:$0xf]
      %v453 = vld [vmem:[%s408 + $0x10] sm:$0xf]
      %v454 = vld [vmem:[%s408 + $0x14] sm:$0xf]
      %v455 = vld [vmem:[%s408 + $0x18] sm:$0xf]
      %v456 = vld [vmem:[%s408 + $0x1c] sm:$0xf]
      %v458 = vlaneseq
      %v459 = vshrl.u32 %v458, 7
      %v460 = vsub.s32 0, %v459
      %v461 = vrot.slane %v436, %v460
      %v471 = vunpack.c.l.b16 %v424
      %v472 = vunpack.c.l.b16 %v425
      %v473 = vunpack.c.l.b16 %v426
      %v474 = vunpack.c.l.b16 %v427
      %v475 = vunpack.c.l.b16 %v428
      %v476 = vunpack.c.l.b16 %v429
      %v477 = vunpack.c.l.b16 %v430
      %v478 = vunpack.c.l.b16 %v431
      %v479 = vpack.c.b16 %v472, %v471
      %v480 = vpack.c.b16 %v474, %v473
      %v481 = vpack.c.b16 %v476, %v475
      %v482 = vpack.c.b16 %v478, %v477
      %v487 = vunpack.c.l.b16 %v432
      %v488 = vunpack.c.l.b16 %v433
      %v489 = vunpack.c.l.b16 %v434
      %v490 = vunpack.c.l.b16 %v435
      %v491 = vpack.c.b16 %v488, %v487
      %v492 = vpack.c.b16 %v490, %v489
      %vm495 = vcmask 261120
      %v497 = vsel %vm495, %v479, 0
      %v500 = vsel %vm495, %v480, 0
      %v503 = vsel %vm495, %v481, 0
      %v506 = vsel %vm495, %v482, 0
      %508 = vmatprep.subr.bf16.mxu0 0
      %509 = vmatpush1.bf16.msra.mxu0 %v491
      %510 = vmatprep.subr.bf16.mxu0 0
      %511 = vmatpush1.bf16.msra.mxu0 %v492
      %512 = vmatprep.subr.bf16.mxu0 0
      %513 = vmatpush1.bf16.msra.mxu0 0
      %514 = vmatprep.subr.bf16.mxu0 0
      %515 = vmatpush1.bf16.msra.mxu0 0
      %516 = vmatprep.subr.bf16.mxu0 0
      %517 = vmatpush1.bf16.msra.mxu0 0
      %518 = vmatprep.subr.bf16.mxu0 0
      %519 = vmatpush1.bf16.msra.mxu0 0
      %520 = vmatprep.subr.bf16.mxu0 0
      %521 = vmatpush1.bf16.msra.mxu0 0
      %522 = vmatprep.subr.bf16.mxu0 0
      %523 = vmatpush1.bf16.msra.mxu0 0
      %524 = vmatprep.subr.bf16.mxu0 0
      %525 = vmatpush1.bf16.msra.mxu0 0
      %526 = vmatprep.subr.bf16.mxu0 0
      %527 = vmatpush1.bf16.msra.mxu0 0
      %528 = vmatprep.subr.bf16.mxu0 0
      %529 = vmatpush1.bf16.msra.mxu0 0
      %530 = vmatprep.subr.bf16.mxu0 0
      %531 = vmatpush1.bf16.msra.mxu0 0
      %532 = vmatprep.subr.bf16.mxu0 0
      %533 = vmatpush1.bf16.msra.mxu0 0
      %534 = vmatprep.subr.bf16.mxu0 0
      %535 = vmatpush1.bf16.msra.mxu0 0
      %536 = vmatprep.subr.bf16.mxu0 0
      %537 = vmatpush1.bf16.msra.mxu0 0
      %538 = vmatprep.subr.bf16.mxu0 0
      %539 = vmatpush1.bf16.msra.mxu0 0
      %540 = vmatprep.mubr.bf16.mxu0 0
      %541 = vmatmul.mubr.bf16.gmra.mrb[0].mxu0 %v497
      %v542 = vpop.f32.mrb[0].mxu0
      %v543 = vadd.f32 %v461, %v542
      %v544 = vpop.f32.mrb[0].mxu0
      %v545 = vpop.f32.mrb[0].mxu0
      %v546 = vadd.f32 %v461, %v545
      %v547 = vpop.f32.mrb[0].mxu0
      %548 = vmatprep.mubr.bf16.mxu0 0
      %549 = vmatmul.mubr.bf16.gmra.mrb[0].mxu0 %v500
      %v550 = vpop.f32.mrb[0].mxu0
      %v551 = vadd.f32 %v461, %v550
      %v552 = vpop.f32.mrb[0].mxu0
      %v553 = vpop.f32.mrb[0].mxu0
      %v554 = vadd.f32 %v461, %v553
      %v555 = vpop.f32.mrb[0].mxu0
      %556 = vmatprep.mubr.bf16.mxu0 0
      %557 = vmatmul.mubr.bf16.gmra.mrb[0].mxu0 %v503
      %v558 = vpop.f32.mrb[0].mxu0
      %v559 = vadd.f32 %v461, %v558
      %v560 = vpop.f32.mrb[0].mxu0
      %v561 = vpop.f32.mrb[0].mxu0
      %v562 = vadd.f32 %v461, %v561
      %v563 = vpop.f32.mrb[0].mxu0
      %564 = vmatprep.mubr.bf16.mxu0 0
      %565 = vmatmul.mubr.bf16.gmra.mrb[0].mxu0 %v506
      %v566 = vpop.f32.mrb[0].mxu0
      %v567 = vadd.f32 %v461, %v566
      %v568 = vpop.f32.mrb[0].mxu0
      %v569 = vpop.f32.mrb[0].mxu0
      %v570 = vadd.f32 %v461, %v569
      %v571 = vpop.f32.mrb[0].mxu0
      %572 = vdwg.mxu0
      %v573 = vpack.c.bf16 %v546, %v543
      %v574 = vpack.c.bf16 %v554, %v551
      %v575 = vpack.c.bf16 %v562, %v559
      %v576 = vpack.c.bf16 %v570, %v567
      %v581 = vunpack.c.l.b16 %v437
      %v582 = vunpack.c.l.b16 %v438
      %v583 = vunpack.c.l.b16 %v439
      %v584 = vunpack.c.l.b16 %v440
      %v585 = vpack.c.b16 %v582, %v581
      %v586 = vpack.c.b16 %v584, %v583
      %v590 = vsel %vm495, %v573, 0
      %v593 = vsel %vm495, %v574, 0
      %v596 = vsel %vm495, %v575, 0
      %v599 = vsel %vm495, %v576, 0
      %601 = vmatprep.subr.bf16.mxu0 0
      %602 = vmatpush1.bf16.msra.mxu0 %v585
      %603 = vmatprep.subr.bf16.mxu0 0
      %604 = vmatpush1.bf16.msra.mxu0 %v586
      %605 = vmatprep.subr.bf16.mxu0 0
      %606 = vmatpush1.bf16.msra.mxu0 0
      %607 = vmatprep.subr.bf16.mxu0 0
      %608 = vmatpush1.bf16.msra.mxu0 0
      %609 = vmatprep.subr.bf16.mxu0 0
      %610 = vmatpush1.bf16.msra.mxu0 0
      %611 = vmatprep.subr.bf16.mxu0 0
      %612 = vmatpush1.bf16.msra.mxu0 0
      %613 = vmatprep.subr.bf16.mxu0 0
      %614 = vmatpush1.bf16.msra.mxu0 0
      %615 = vmatprep.subr.bf16.mxu0 0
      %616 = vmatpush1.bf16.msra.mxu0 0
      %617 = vmatprep.subr.bf16.mxu0 0
      %618 = vmatpush1.bf16.msra.mxu0 0
      %619 = vmatprep.subr.bf16.mxu0 0
      %620 = vmatpush1.bf16.msra.mxu0 0
      %621 = vmatprep.subr.bf16.mxu0 0
      %622 = vmatpush1.bf16.msra.mxu0 0
      %623 = vmatprep.subr.bf16.mxu0 0
      %624 = vmatpush1.bf16.msra.mxu0 0
      %625 = vmatprep.subr.bf16.mxu0 0
      %626 = vmatpush1.bf16.msra.mxu0 0
      %627 = vmatprep.subr.bf16.mxu0 0
      %628 = vmatpush1.bf16.msra.mxu0 0
      %629 = vmatprep.subr.bf16.mxu0 0
      %630 = vmatpush1.bf16.msra.mxu0 0
      %631 = vmatprep.subr.bf16.mxu0 0
      %632 = vmatpush1.bf16.msra.mxu0 0
      %633 = vmatprep.mubr.bf16.mxu0 0
      %634 = vmatmul.mubr.bf16.gmra.mrb[0].mxu0 %v590
      %v635 = vpop.f32.mrb[0].mxu0
      %v636 = vadd.f32 0.0, %v635
      %v637 = vpop.f32.mrb[0].mxu0
      %v638 = vpop.f32.mrb[0].mxu0
      %v639 = vadd.f32 0.0, %v638
      %v640 = vpop.f32.mrb[0].mxu0
      %641 = vmatprep.mubr.bf16.mxu0 0
      %642 = vmatmul.mubr.bf16.gmra.mrb[0].mxu0 %v593
      %v643 = vpop.f32.mrb[0].mxu0
      %v644 = vadd.f32 0.0, %v643
      %v645 = vpop.f32.mrb[0].mxu0
      %v646 = vpop.f32.mrb[0].mxu0
      %v647 = vadd.f32 0.0, %v646
      %v648 = vpop.f32.mrb[0].mxu0
      %649 = vmatprep.mubr.bf16.mxu0 0
      %650 = vmatmul.mubr.bf16.gmra.mrb[0].mxu0 %v596
      %v651 = vpop.f32.mrb[0].mxu0
      %v652 = vadd.f32 0.0, %v651
      %v653 = vpop.f32.mrb[0].mxu0
      %v654 = vpop.f32.mrb[0].mxu0
      %v655 = vadd.f32 0.0, %v654
      %v656 = vpop.f32.mrb[0].mxu0
      %657 = vmatprep.mubr.bf16.mxu0 0
      %658 = vmatmul.mubr.bf16.gmra.mrb[0].mxu0 %v599
      %v659 = vpop.f32.mrb[0].mxu0
      %v660 = vadd.f32 0.0, %v659
      %v661 = vpop.f32.mrb[0].mxu0
      %v662 = vpop.f32.mrb[0].mxu0
      %v663 = vadd.f32 0.0, %v662
      %v664 = vpop.f32.mrb[0].mxu0
      %665 = vdwg.mxu0
      %v666 = vpack.c.bf16 %v639, %v636
      %v667 = vpack.c.bf16 %v647, %v644
      %v668 = vpack.c.bf16 %v655, %v652
      %v669 = vpack.c.bf16 %v663, %v660
      %vm670 = vcmask 64512
      %v672 = vsel %vm670, %v666, 0
      %v675 = vsel %vm670, %v667, 0
      %v678 = vsel %vm670, %v668, 0
      %v681 = vsel %vm670, %v669, 0
      %vm683 = vcmask 1043456
      %v685 = vsel %vm683, %v441, 0
      %687 = vmatprep.subr.bf16.mxu0 0
      %688 = vmatpush1.bf16.msra.mxu0 %v685
      %689 = vmatprep.subr.bf16.mxu0 0
      %690 = vmatpush1.bf16.msra.mxu0 0
      %691 = vmatprep.subr.bf16.mxu0 0
      %692 = vmatpush1.bf16.msra.mxu0 0
      %693 = vmatprep.subr.bf16.mxu0 0
      %694 = vmatpush1.bf16.msra.mxu0 0
      %695 = vmatprep.subr.bf16.mxu0 0
      %696 = vmatpush1.bf16.msra.mxu0 0
      %697 = vmatprep.subr.bf16.mxu0 0
      %698 = vmatpush1.bf16.msra.mxu0 0
      %699 = vmatprep.subr.bf16.mxu0 0
      %700 = vmatpush1.bf16.msra.mxu0 0
      %701 = vmatprep.subr.bf16.mxu0 0
      %702 = vmatpush1.bf16.msra.mxu0 0
      %703 = vmatprep.subr.bf16.mxu0 0
      %704 = vmatpush1.bf16.msra.mxu0 0
      %705 = vmatprep.subr.bf16.mxu0 0
      %706 = vmatpush1.bf16.msra.mxu0 0
      %707 = vmatprep.subr.bf16.mxu0 0
      %708 = vmatpush1.bf16.msra.mxu0 0
      %709 = vmatprep.subr.bf16.mxu0 0
      %710 = vmatpush1.bf16.msra.mxu0 0
      %711 = vmatprep.subr.bf16.mxu0 0
      %712 = vmatpush1.bf16.msra.mxu0 0
      %713 = vmatprep.subr.bf16.mxu0 0
      %714 = vmatpush1.bf16.msra.mxu0 0
      %715 = vmatprep.subr.bf16.mxu0 0
      %716 = vmatpush1.bf16.msra.mxu0 0
      %717 = vmatprep.subr.bf16.mxu0 0
      %718 = vmatpush1.bf16.msra.mxu0 0
      %719 = vmatprep.mubr.bf16.mxu0 0
      %720 = vmatmul.mubr.bf16.gmra.mrb[0].mxu0 %v672
      %v721 = vpop.f32.mrb[0].mxu0
      %v722 = vadd.f32 0.0, %v721
      %v723 = vpop.f32.mrb[0].mxu0
      %v724 = vpop.f32.mrb[0].mxu0
      %v725 = vadd.f32 0.0, %v724
      %v726 = vpop.f32.mrb[0].mxu0
      %727 = vmatprep.mubr.bf16.mxu0 0
      %728 = vmatmul.mubr.bf16.gmra.mrb[0].mxu0 %v675
      %v729 = vpop.f32.mrb[0].mxu0
      %v730 = vadd.f32 0.0, %v729
      %v731 = vpop.f32.mrb[0].mxu0
      %v732 = vpop.f32.mrb[0].mxu0
      %v733 = vadd.f32 0.0, %v732
      %v734 = vpop.f32.mrb[0].mxu0
      %735 = vmatprep.mubr.bf16.mxu0 0
      %736 = vmatmul.mubr.bf16.gmra.mrb[0].mxu0 %v678
      %v737 = vpop.f32.mrb[0].mxu0
      %v738 = vadd.f32 0.0, %v737
      %v739 = vpop.f32.mrb[0].mxu0
      %v740 = vpop.f32.mrb[0].mxu0
      %v741 = vadd.f32 0.0, %v740
      %v742 = vpop.f32.mrb[0].mxu0
      %743 = vmatprep.mubr.bf16.mxu0 0
      %744 = vmatmul.mubr.bf16.gmra.mrb[0].mxu0 %v681
      %v745 = vpop.f32.mrb[0].mxu0
      %v746 = vadd.f32 0.0, %v745
      %v747 = vpop.f32.mrb[0].mxu0
      %v748 = vpop.f32.mrb[0].mxu0
      %v749 = vadd.f32 0.0, %v748
      %v750 = vpop.f32.mrb[0].mxu0
      %751 = vdwg.mxu0
      %v752 = vsub.f32 %v543, %v722
      %v753 = vsub.f32 %v546, %v725
      %v754 = vsub.f32 %v551, %v730
      %v755 = vsub.f32 %v554, %v733
      %v756 = vsub.f32 %v559, %v738
      %v757 = vsub.f32 %v562, %v741
      %v758 = vsub.f32 %v567, %v746
      %v759 = vsub.f32 %v570, %v749
      %v760 = vmul.f32 %v752, %v752
      %v761 = vmul.f32 %v753, %v753
      %v762 = vmul.f32 %v754, %v754
      %v763 = vmul.f32 %v755, %v755
      %v764 = vmul.f32 %v756, %v756
      %v765 = vmul.f32 %v757, %v757
      %v766 = vmul.f32 %v758, %v758
      %v767 = vmul.f32 %v759, %v759
      %v768 = vpack.c.bf16 %v761, %v760
      %v769 = vpack.c.bf16 %v763, %v762
      %v770 = vpack.c.bf16 %v765, %v764
      %v771 = vpack.c.bf16 %v767, %v766
      %v773 = vsel %vm495, %v768, 0
      %v776 = vsel %vm495, %v769, 0
      %v779 = vsel %vm495, %v770, 0
      %v782 = vsel %vm495, %v771, 0
      %784 = vmatprep.subr.bf16.mxu0 0
      %785 = vmatpush1.bf16.msra.mxu0 %v585
      %786 = vmatprep.subr.bf16.mxu0 0
      %787 = vmatpush1.bf16.msra.mxu0 %v586
      %788 = vmatprep.subr.bf16.mxu0 0
      %789 = vmatpush1.bf16.msra.mxu0 0
      %790 = vmatprep.subr.bf16.mxu0 0
      %791 = vmatpush1.bf16.msra.mxu0 0
      %792 = vmatprep.subr.bf16.mxu0 0
      %793 = vmatpush1.bf16.msra.mxu0 0
      %794 = vmatprep.subr.bf16.mxu0 0
      %795 = vmatpush1.bf16.msra.mxu0 0
      %796 = vmatprep.subr.bf16.mxu0 0
      %797 = vmatpush1.bf16.msra.mxu0 0
      %798 = vmatprep.subr.bf16.mxu0 0
      %799 = vmatpush1.bf16.msra.mxu0 0
      %800 = vmatprep.subr.bf16.mxu0 0
      %801 = vmatpush1.bf16.msra.mxu0 0
      %802 = vmatprep.subr.bf16.mxu0 0
      %803 = vmatpush1.bf16.msra.mxu0 0
      %804 = vmatprep.subr.bf16.mxu0 0
      %805 = vmatpush1.bf16.msra.mxu0 0
      %806 = vmatprep.subr.bf16.mxu0 0
      %807 = vmatpush1.bf16.msra.mxu0 0
      %808 = vmatprep.subr.bf16.mxu0 0
      %809 = vmatpush1.bf16.msra.mxu0 0
      %810 = vmatprep.subr.bf16.mxu0 0
      %811 = vmatpush1.bf16.msra.mxu0 0
      %812 = vmatprep.subr.bf16.mxu0 0
      %813 = vmatpush1.bf16.msra.mxu0 0
      %814 = vmatprep.subr.bf16.mxu0 0
      %815 = vmatpush1.bf16.msra.mxu0 0
      %816 = vmatprep.mubr.bf16.mxu0 0
      %817 = vmatmul.mubr.bf16.gmra.mrb[0].mxu0 %v773
      %v818 = vpop.f32.mrb[0].mxu0
      %v819 = vadd.f32 1e-06, %v818
      %v820 = vpop.f32.mrb[0].mxu0
      %v821 = vpop.f32.mrb[0].mxu0
      %v822 = vadd.f32 1e-06, %v821
      %v823 = vpop.f32.mrb[0].mxu0
      %824 = vmatprep.mubr.bf16.mxu0 0
      %825 = vmatmul.mubr.bf16.gmra.mrb[0].mxu0 %v776
      %v826 = vpop.f32.mrb[0].mxu0
      %v827 = vadd.f32 1e-06, %v826
      %v828 = vpop.f32.mrb[0].mxu0
      %v829 = vpop.f32.mrb[0].mxu0
      %v830 = vadd.f32 1e-06, %v829
      %v831 = vpop.f32.mrb[0].mxu0
      %832 = vmatprep.mubr.bf16.mxu0 0
      %833 = vmatmul.mubr.bf16.gmra.mrb[0].mxu0 %v779
      %v834 = vpop.f32.mrb[0].mxu0
      %v835 = vadd.f32 1e-06, %v834
      %v836 = vpop.f32.mrb[0].mxu0
      %v837 = vpop.f32.mrb[0].mxu0
      %v838 = vadd.f32 1e-06, %v837
      %v839 = vpop.f32.mrb[0].mxu0
      %840 = vmatprep.mubr.bf16.mxu0 0
      %841 = vmatmul.mubr.bf16.gmra.mrb[0].mxu0 %v782
      %v842 = vpop.f32.mrb[0].mxu0
      %v843 = vadd.f32 1e-06, %v842
      %v844 = vpop.f32.mrb[0].mxu0
      %v845 = vpop.f32.mrb[0].mxu0
      %v846 = vadd.f32 1e-06, %v845
      %v847 = vpop.f32.mrb[0].mxu0
      %848 = vdwg.mxu0
      %v849 = vrsqrt.pop %v819
      %v850 = vrsqrt.pop %v822
      %v851 = vrsqrt.pop %v827
      %v852 = vrsqrt.pop %v830
      %v853 = vrsqrt.pop %v835
      %v854 = vrsqrt.pop %v838
      %v855 = vrsqrt.pop %v843
      %v856 = vrsqrt.pop %v846
      %v857 = vpack.c.bf16 %v850, %v849
      %v858 = vpack.c.bf16 %v852, %v851
      %v859 = vpack.c.bf16 %v854, %v853
      %v860 = vpack.c.bf16 %v856, %v855
      %v862 = vsel %vm670, %v857, 0
      %v865 = vsel %vm670, %v858, 0
      %v868 = vsel %vm670, %v859, 0
      %v871 = vsel %vm670, %v860, 0
      %873 = vmatprep.subr.bf16.mxu0 0
      %874 = vmatpush1.bf16.msra.mxu0 %v685
      %875 = vmatprep.subr.bf16.mxu0 0
      %876 = vmatpush1.bf16.msra.mxu0 0
      %877 = vmatprep.subr.bf16.mxu0 0
      %878 = vmatpush1.bf16.msra.mxu0 0
      %879 = vmatprep.subr.bf16.mxu0 0
      %880 = vmatpush1.bf16.msra.mxu0 0
      %881 = vmatprep.subr.bf16.mxu0 0
      %882 = vmatpush1.bf16.msra.mxu0 0
      %883 = vmatprep.subr.bf16.mxu0 0
      %884 = vmatpush1.bf16.msra.mxu0 0
      %885 = vmatprep.subr.bf16.mxu0 0
      %886 = vmatpush1.bf16.msra.mxu0 0
      %887 = vmatprep.subr.bf16.mxu0 0
      %888 = vmatpush1.bf16.msra.mxu0 0
      %889 = vmatprep.subr.bf16.mxu0 0
      %890 = vmatpush1.bf16.msra.mxu0 0
      %891 = vmatprep.subr.bf16.mxu0 0
      %892 = vmatpush1.bf16.msra.mxu0 0
      %893 = vmatprep.subr.bf16.mxu0 0
      %894 = vmatpush1.bf16.msra.mxu0 0
      %895 = vmatprep.subr.bf16.mxu0 0
      %896 = vmatpush1.bf16.msra.mxu0 0
      %897 = vmatprep.subr.bf16.mxu0 0
      %898 = vmatpush1.bf16.msra.mxu0 0
      %899 = vmatprep.subr.bf16.mxu0 0
      %900 = vmatpush1.bf16.msra.mxu0 0
      %901 = vmatprep.subr.bf16.mxu0 0
      %902 = vmatpush1.bf16.msra.mxu0 0
      %903 = vmatprep.subr.bf16.mxu0 0
      %904 = vmatpush1.bf16.msra.mxu0 0
      %905 = vmatprep.mubr.bf16.mxu0 0
      %906 = vmatmul.mubr.bf16.gmra.mrb[0].mxu0 %v862
      %v907 = vpop.f32.mrb[0].mxu0
      %v908 = vadd.f32 0.0, %v907
      %v909 = vpop.f32.mrb[0].mxu0
      %v910 = vpop.f32.mrb[0].mxu0
      %v911 = vadd.f32 0.0, %v910
      %v912 = vpop.f32.mrb[0].mxu0
      %913 = vmatprep.mubr.bf16.mxu0 0
      %914 = vmatmul.mubr.bf16.gmra.mrb[0].mxu0 %v865
      %v915 = vpop.f32.mrb[0].mxu0
      %v916 = vadd.f32 0.0, %v915
      %v917 = vpop.f32.mrb[0].mxu0
      %v918 = vpop.f32.mrb[0].mxu0
      %v919 = vadd.f32 0.0, %v918
      %v920 = vpop.f32.mrb[0].mxu0
      %921 = vmatprep.mubr.bf16.mxu0 0
      %922 = vmatmul.mubr.bf16.gmra.mrb[0].mxu0 %v868
      %v923 = vpop.f32.mrb[0].mxu0
      %v924 = vadd.f32 0.0, %v923
      %v925 = vpop.f32.mrb[0].mxu0
      %v926 = vpop.f32.mrb[0].mxu0
      %v927 = vadd.f32 0.0, %v926
      %v928 = vpop.f32.mrb[0].mxu0
      %929 = vmatprep.mubr.bf16.mxu0 0
      %930 = vmatmul.mubr.bf16.gmra.mrb[0].mxu0 %v871
      %v931 = vpop.f32.mrb[0].mxu0
      %v932 = vadd.f32 0.0, %v931
      %v933 = vpop.f32.mrb[0].mxu0
      %v934 = vpop.f32.mrb[0].mxu0
      %v935 = vadd.f32 0.0, %v934
      %v936 = vpop.f32.mrb[0].mxu0
      %937 = vdwg.mxu0
      %v939 = vlaneseq
      %v940 = vshrl.u32 %v939, 7
      %v941 = vsub.s32 0, %v940
      %v942 = vrot.slane %v442, %v941
      %v944 = vmul.f32 %v908, %v942
      %v945 = vmul.f32 %v911, %v942
      %v946 = vmul.f32 %v916, %v942
      %v947 = vmul.f32 %v919, %v942
      %v948 = vmul.f32 %v924, %v942
      %v949 = vmul.f32 %v927, %v942
      %v950 = vmul.f32 %v932, %v942
      %v951 = vmul.f32 %v935, %v942
      %v952 = vmul.f32 %v752, %v944
      %v953 = vmul.f32 %v753, %v945
      %v954 = vmul.f32 %v754, %v946
      %v955 = vmul.f32 %v755, %v947
      %v956 = vmul.f32 %v756, %v948
      %v957 = vmul.f32 %v757, %v949
      %v958 = vmul.f32 %v758, %v950
      %v959 = vmul.f32 %v759, %v951
      %v961 = vlaneseq
      %v962 = vshrl.u32 %v961, 7
      %v963 = vsub.s32 0, %v962
      %v964 = vrot.slane %v443, %v963
      %v966 = vadd.f32 %v952, %v964
      %v967 = vadd.f32 %v953, %v964
      %v968 = vadd.f32 %v954, %v964
      %v969 = vadd.f32 %v955, %v964
      %v970 = vadd.f32 %v956, %v964
      %v971 = vadd.f32 %v957, %v964
      %v972 = vadd.f32 %v958, %v964
      %v973 = vadd.f32 %v959, %v964
      %v974 = vpack.c.bf16 %v967, %v966
      %v975 = vpack.c.bf16 %v969, %v968
      %v976 = vpack.c.bf16 %v971, %v970
      %v977 = vpack.c.bf16 %v973, %v972
      %v978 = vmul.bf16 %v974, 1056980736
      %v979 = vmul.bf16 %v975, 1056980736
      %v980 = vmul.bf16 %v976, 1056980736
      %v981 = vmul.bf16 %v977, 1056980736
      %v982 = vmul.bf16 %v974, 1027030327
      %v983 = vmul.bf16 %v975, 1027030327
      %v984 = vmul.bf16 %v976, 1027030327
      %v985 = vmul.bf16 %v977, 1027030327
      %v986 = vmul.bf16 %v982, %v974
      %v987 = vmul.bf16 %v983, %v975
      %v988 = vmul.bf16 %v984, %v976
      %v989 = vmul.bf16 %v985, %v977
      %v990 = vmul.bf16 %v986, %v974
      %v991 = vmul.bf16 %v987, %v975
      %v992 = vmul.bf16 %v988, %v976
      %v993 = vmul.bf16 %v989, %v977
      %v994 = vadd.bf16 %v974, %v990
      %v995 = vadd.bf16 %v975, %v991
      %v996 = vadd.bf16 %v976, %v992
      %v997 = vadd.bf16 %v977, %v993
      %v998 = vmul.bf16 %v994, 1061961548
      %v999 = vmul.bf16 %v995, 1061961548
      %v1000 = vmul.bf16 %v996, 1061961548
      %v1001 = vmul.bf16 %v997, 1061961548
      %v1002 = vtanh.bf16.pop %v998
      %v1003 = vtanh.bf16.pop %v999
      %v1004 = vtanh.bf16.pop %v1000
      %v1005 = vtanh.bf16.pop %v1001
      %v1006 = vadd.bf16 %v1002, 1065369472
      %v1007 = vadd.bf16 %v1003, 1065369472
      %v1008 = vadd.bf16 %v1004, 1065369472
      %v1009 = vadd.bf16 %v1005, 1065369472
      %v1010 = vmul.bf16 %v978, %v1006
      %v1011 = vmul.bf16 %v979, %v1007
      %v1012 = vmul.bf16 %v980, %v1008
      %v1013 = vmul.bf16 %v981, %v1009
      %v1015 = vlaneseq
      %v1016 = vshrl.u32 %v1015, 7
      %v1017 = vsub.s32 0, %v1016
      %v1018 = vrot.slane %v448, %v1017
      %v1024 = vunpack.c.l.b16 %v444
      %v1025 = vunpack.c.l.b16 %v445
      %v1026 = vunpack.c.l.b16 %v446
      %v1027 = vunpack.c.l.b16 %v447
      %v1028 = vpack.c.b16 %v1025, %v1024
      %v1029 = vpack.c.b16 %v1027, %v1026
      %v1033 = vsel %vm495, %v1010, 0
      %v1036 = vsel %vm495, %v1011, 0
      %v1039 = vsel %vm495, %v1012, 0
      %v1042 = vsel %vm495, %v1013, 0
      %1044 = vmatprep.subr.bf16.mxu0 0
      %1045 = vmatpush1.bf16.msra.mxu0 %v1028
      %1046 = vmatprep.subr.bf16.mxu0 0
      %1047 = vmatpush1.bf16.msra.mxu0 %v1029
      %1048 = vmatprep.subr.bf16.mxu0 0
      %1049 = vmatpush1.bf16.msra.mxu0 0
      %1050 = vmatprep.subr.bf16.mxu0 0
      %1051 = vmatpush1.bf16.msra.mxu0 0
      %1052 = vmatprep.subr.bf16.mxu0 0
      %1053 = vmatpush1.bf16.msra.mxu0 0
      %1054 = vmatprep.subr.bf16.mxu0 0
      %1055 = vmatpush1.bf16.msra.mxu0 0
      %1056 = vmatprep.subr.bf16.mxu0 0
      %1057 = vmatpush1.bf16.msra.mxu0 0
      %1058 = vmatprep.subr.bf16.mxu0 0
      %1059 = vmatpush1.bf16.msra.mxu0 0
      %1060 = vmatprep.subr.bf16.mxu0 0
      %1061 = vmatpush1.bf16.msra.mxu0 0
      %1062 = vmatprep.subr.bf16.mxu0 0
      %1063 = vmatpush1.bf16.msra.mxu0 0
      %1064 = vmatprep.subr.bf16.mxu0 0
      %1065 = vmatpush1.bf16.msra.mxu0 0
      %1066 = vmatprep.subr.bf16.mxu0 0
      %1067 = vmatpush1.bf16.msra.mxu0 0
      %1068 = vmatprep.subr.bf16.mxu0 0
      %1069 = vmatpush1.bf16.msra.mxu0 0
      %1070 = vmatprep.subr.bf16.mxu0 0
      %1071 = vmatpush1.bf16.msra.mxu0 0
      %1072 = vmatprep.subr.bf16.mxu0 0
      %1073 = vmatpush1.bf16.msra.mxu0 0
      %1074 = vmatprep.subr.bf16.mxu0 0
      %1075 = vmatpush1.bf16.msra.mxu0 0
      %1076 = vmatprep.mubr.bf16.mxu0 0
      %1077 = vmatmul.mubr.bf16.gmra.mrb[0].mxu0 %v1033
      %v1078 = vpop.f32.mrb[0].mxu0
      %v1079 = vadd.f32 %v1018, %v1078
      %v1080 = vpop.f32.mrb[0].mxu0
      %v1081 = vpop.f32.mrb[0].mxu0
      %v1082 = vadd.f32 %v1018, %v1081
      %v1083 = vpop.f32.mrb[0].mxu0
      %1084 = vmatprep.mubr.bf16.mxu0 0
      %1085 = vmatmul.mubr.bf16.gmra.mrb[0].mxu0 %v1036
      %v1086 = vpop.f32.mrb[0].mxu0
      %v1087 = vadd.f32 %v1018, %v1086
      %v1088 = vpop.f32.mrb[0].mxu0
      %v1089 = vpop.f32.mrb[0].mxu0
      %v1090 = vadd.f32 %v1018, %v1089
      %v1091 = vpop.f32.mrb[0].mxu0
      %1092 = vmatprep.mubr.bf16.mxu0 0
      %1093 = vmatmul.mubr.bf16.gmra.mrb[0].mxu0 %v1039
      %v1094 = vpop.f32.mrb[0].mxu0
      %v1095 = vadd.f32 %v1018, %v1094
      %v1096 = vpop.f32.mrb[0].mxu0
      %v1097 = vpop.f32.mrb[0].mxu0
      %v1098 = vadd.f32 %v1018, %v1097
      %v1099 = vpop.f32.mrb[0].mxu0
      %1100 = vmatprep.mubr.bf16.mxu0 0
      %1101 = vmatmul.mubr.bf16.gmra.mrb[0].mxu0 %v1042
      %v1102 = vpop.f32.mrb[0].mxu0
      %v1103 = vadd.f32 %v1018, %v1102
      %v1104 = vpop.f32.mrb[0].mxu0
      %v1105 = vpop.f32.mrb[0].mxu0
      %v1106 = vadd.f32 %v1018, %v1105
      %v1107 = vpop.f32.mrb[0].mxu0
      %1108 = vdwg.mxu0
      %v1109 = vpack.c.bf16 %v1082, %v1079
      %v1110 = vpack.c.bf16 %v1090, %v1087
      %v1111 = vpack.c.bf16 %v1098, %v1095
      %v1112 = vpack.c.bf16 %v1106, %v1103
      %v1113 = vmul.bf16 %v1109, 1056980736
      %v1114 = vmul.bf16 %v1110, 1056980736
      %v1115 = vmul.bf16 %v1111, 1056980736
      %v1116 = vmul.bf16 %v1112, 1056980736
      %v1117 = vmul.bf16 %v1109, 1027030327
      %v1118 = vmul.bf16 %v1110, 1027030327
      %v1119 = vmul.bf16 %v1111, 1027030327
      %v1120 = vmul.bf16 %v1112, 1027030327
      %v1121 = vmul.bf16 %v1117, %v1109
      %v1122 = vmul.bf16 %v1118, %v1110
      %v1123 = vmul.bf16 %v1119, %v1111
      %v1124 = vmul.bf16 %v1120, %v1112
      %v1125 = vmul.bf16 %v1121, %v1109
      %v1126 = vmul.bf16 %v1122, %v1110
      %v1127 = vmul.bf16 %v1123, %v1111
      %v1128 = vmul.bf16 %v1124, %v1112
      %v1129 = vadd.bf16 %v1109, %v1125
      %v1130 = vadd.bf16 %v1110, %v1126
      %v1131 = vadd.bf16 %v1111, %v1127
      %v1132 = vadd.bf16 %v1112, %v1128
      %v1133 = vmul.bf16 %v1129, 1061961548
      %v1134 = vmul.bf16 %v1130, 1061961548
      %v1135 = vmul.bf16 %v1131, 1061961548
      %v1136 = vmul.bf16 %v1132, 1061961548
      %v1137 = vtanh.bf16.pop %v1133
      %v1138 = vtanh.bf16.pop %v1134
      %v1139 = vtanh.bf16.pop %v1135
      %v1140 = vtanh.bf16.pop %v1136
      %v1141 = vadd.bf16 %v1137, 1065369472
      %v1142 = vadd.bf16 %v1138, 1065369472
      %v1143 = vadd.bf16 %v1139, 1065369472
      %v1144 = vadd.bf16 %v1140, 1065369472
      %v1145 = vmul.bf16 %v1113, %v1141
      %v1146 = vmul.bf16 %v1114, %v1142
      %v1147 = vmul.bf16 %v1115, %v1143
      %v1148 = vmul.bf16 %v1116, %v1144
      %v1157 = vunpack.c.l.b16 %v449
      %v1158 = vunpack.c.l.b16 %v450
      %v1159 = vunpack.c.l.b16 %v451
      %v1160 = vunpack.c.l.b16 %v452
      %v1161 = vunpack.c.l.b16 %v453
      %v1162 = vunpack.c.l.b16 %v454
      %v1163 = vunpack.c.l.b16 %v455
      %v1164 = vunpack.c.l.b16 %v456
      %v1165 = vpack.c.b16 %v1158, %v1157
      %v1166 = vpack.c.b16 %v1160, %v1159
      %v1167 = vpack.c.b16 %v1162, %v1161
      %v1168 = vpack.c.b16 %v1164, %v1163
      %vm1173 = vcmask 523264
      %v1175 = vsel %vm1173, %v1145, 0
      %v1178 = vsel %vm1173, %v1146, 0
      %v1181 = vsel %vm1173, %v1147, 0
      %v1184 = vsel %vm1173, %v1148, 0
      %1186 = vmatprep.subr.bf16.mxu0 0
      %1187 = vmatpush1.bf16.msra.mxu0 %v1165
      %1188 = vmatprep.subr.bf16.mxu0 0
      %1189 = vmatpush1.bf16.msra.mxu0 %v1166
      %1190 = vmatprep.subr.bf16.mxu0 0
      %1191 = vmatpush1.bf16.msra.mxu0 %v1167
      %1192 = vmatprep.subr.bf16.mxu0 0
      %1193 = vmatpush1.bf16.msra.mxu0 %v1168
      %1194 = vmatprep.subr.bf16.mxu0 0
      %1195 = vmatpush1.bf16.msra.mxu0 0
      %1196 = vmatprep.subr.bf16.mxu0 0
      %1197 = vmatpush1.bf16.msra.mxu0 0
      %1198 = vmatprep.subr.bf16.mxu0 0
      %1199 = vmatpush1.bf16.msra.mxu0 0
      %1200 = vmatprep.subr.bf16.mxu0 0
      %1201 = vmatpush1.bf16.msra.mxu0 0
      %1202 = vmatprep.subr.bf16.mxu0 0
      %1203 = vmatpush1.bf16.msra.mxu0 0
      %1204 = vmatprep.subr.bf16.mxu0 0
      %1205 = vmatpush1.bf16.msra.mxu0 0
      %1206 = vmatprep.subr.bf16.mxu0 0
      %1207 = vmatpush1.bf16.msra.mxu0 0
      %1208 = vmatprep.subr.bf16.mxu0 0
      %1209 = vmatpush1.bf16.msra.mxu0 0
      %1210 = vmatprep.subr.bf16.mxu0 0
      %1211 = vmatpush1.bf16.msra.mxu0 0
      %1212 = vmatprep.subr.bf16.mxu0 0
      %1213 = vmatpush1.bf16.msra.mxu0 0
      %1214 = vmatprep.subr.bf16.mxu0 0
      %1215 = vmatpush1.bf16.msra.mxu0 0
      %1216 = vmatprep.subr.bf16.mxu0 0
      %1217 = vmatpush1.bf16.msra.mxu0 0
      %1218 = vmatprep.mubr.bf16.mxu0 0
      %1219 = vmatmul.mubr.bf16.gmra.mrb[0].mxu0 %v1175
      %v1220 = vpop.f32.mrb[0].mxu0
      %v1221 = vadd.f32 0.0, %v1220
      %v1222 = vpop.f32.mrb[0].mxu0
      %v1223 = vpop.f32.mrb[0].mxu0
      %v1224 = vadd.f32 0.0, %v1223
      %v1225 = vpop.f32.mrb[0].mxu0
      %1226 = vmatprep.mubr.bf16.mxu0 0
      %1227 = vmatmul.mubr.bf16.gmra.mrb[0].mxu0 %v1178
      %v1228 = vpop.f32.mrb[0].mxu0
      %v1229 = vadd.f32 0.0, %v1228
      %v1230 = vpop.f32.mrb[0].mxu0
      %v1231 = vpop.f32.mrb[0].mxu0
      %v1232 = vadd.f32 0.0, %v1231
      %v1233 = vpop.f32.mrb[0].mxu0
      %1234 = vmatprep.mubr.bf16.mxu0 0
      %1235 = vmatmul.mubr.bf16.gmra.mrb[0].mxu0 %v1181
      %v1236 = vpop.f32.mrb[0].mxu0
      %v1237 = vadd.f32 0.0, %v1236
      %v1238 = vpop.f32.mrb[0].mxu0
      %v1239 = vpop.f32.mrb[0].mxu0
      %v1240 = vadd.f32 0.0, %v1239
      %v1241 = vpop.f32.mrb[0].mxu0
      %1242 = vmatprep.mubr.bf16.mxu0 0
      %1243 = vmatmul.mubr.bf16.gmra.mrb[0].mxu0 %v1184
      %v1244 = vpop.f32.mrb[0].mxu0
      %v1245 = vadd.f32 0.0, %v1244
      %v1246 = vpop.f32.mrb[0].mxu0
      %v1247 = vpop.f32.mrb[0].mxu0
      %v1248 = vadd.f32 0.0, %v1247
      %v1249 = vpop.f32.mrb[0].mxu0
      %1250 = vdwg.mxu0
      %vm1251 = vcmask 130048
      %1252 = vst.msk [vmem:[%s417] sm:$0xff] %vm1251, %v1221
      %1253 = vst.msk [vmem:[%s417 + $0x8] sm:$0xff] %vm1251, %v1224
      %1254 = vst.msk [vmem:[%s417 + $0x10] sm:$0xff] %vm1251, %v1229
      %1255 = vst.msk [vmem:[%s417 + $0x18] sm:$0xff] %vm1251, %v1232
      %1256 = vst.msk [vmem:[%s417 + $0x20] sm:$0xff] %vm1251, %v1237
      %1257 = vst.msk [vmem:[%s417 + $0x28] sm:$0xff] %vm1251, %v1240
      %1258 = vst.msk [vmem:[%s417 + $0x30] sm:$0xff] %vm1251, %v1245
      %1259 = vst.msk [vmem:[%s417 + $0x38] sm:$0xff] %vm1251, %v1248
      %s1260 = smul.u32 8, %s26
      %p1261 = scmp.lt.s32.totalorder %s25, 1
      %s1262 = scalar_select %p1261, %s25, 1
      %p1263 = scmp.lt.s32.totalorder %s1260, 7
      %s1264 = scalar_select %p1263, %s1260, 7
      %s1265 = smul.addr %s1262, 8
      %s1266 = sadd.s32 %s1264, %s1265
      %s1267 = smul.addr %s1266, 8
      %s1268 = scalar_lea.vmem %s10, %s1267
      // Predicated region
      $region61: #{tpu_custom_call.1} parent=59 // pred_check
        %p1269 = pneg %p275
      $region62: #{tpu_custom_call.1} parent=59 // pred_check_branch
        %1271 = sbr.rel (%p1269) target = $region64
      $region63: #{tpu_custom_call.1} parent=59 // pred_region
        %s1272 = smul.u32 8, %s26
      $region64: #{tpu_custom_call.1} parent=59 // pred_fallthru
        _
    $region60: #{tpu_custom_call.1} parent=5 // pred_fallthru
      _
    %p1273 = scmp.le.s32.totalorder 2, %s16
    // Predicated region
    $region65: #{tpu_custom_call.1} parent=5 // pred_check
      %p1274 = pneg %p1273
    $region66: #{tpu_custom_call.1} parent=5 // pred_check_branch
      %1276 = sbr.rel (%p1274) target = $region68
    $region67: #{tpu_custom_call.1} parent=5 // pred_region
      %s1277 = ssub.s32 %s16, 2
      // Predicated region
      $region69: #{tpu_custom_call.1} parent=67 // pred_check
        %p1278 = pneg %p281
      $region70: #{tpu_custom_call.1} parent=67 // pred_check_branch
        %1280 = sbr.rel (%p1278) target = $region72
      $region71: #{tpu_custom_call.1} parent=67 // pred_region
        %s1281 = smul.u32 8, %s28
        %p1282 = scmp.lt.s32.totalorder %s27, 1
        %s1283 = scalar_select %p1282, %s27, 1
        %p1284 = scmp.lt.s32.totalorder %s1281, 7
        %s1285 = scalar_select %p1284, %s1281, 7
        %s1286 = smul.addr %s1283, 8
        %s1287 = sadd.s32 %s1285, %s1286
        %s1288 = smul.addr %s1287, 8
        %s1289 = scalar_lea.vmem %s10, %s1288
      $region72: #{tpu_custom_call.1} parent=67 // pred_fallthru
        _
    $region68: #{tpu_custom_call.1} parent=5 // pred_fallthru
      _
  $region6: #{tpu_custom_call.1} parent=0 // loop_footer
    %s20 = sadd.s32 1, %s16
  $region7: #{tpu_custom_call.1} parent=0 // loop_footer_branch
    %15 = sbr.rel target = $region3
  $region8: #{tpu_custom_call.1} parent=0 // loop_exit
    _

</llo_original>
